<compile_context>
chip_gen: v6e
topology: v6e:2x2x1
jax: 0.10.0
libtpu: 0.0.40
codegen_flags: <defaults>
</compile_context>

<pallas_src>
import jax
import jax.numpy as jnp
from jax.experimental import pallas as pl
from jax.experimental.pallas import tpu as pltpu

BIT_W = 8
BIT_A = 8
EPS = 1e-5
LANES = 128                      # pad all channel dims onto the full 128-lane axis
QMAX_A = float(2 ** (BIT_A - 1) - 1)

_COMPILER_PARAMS = pltpu.CompilerParams(
    dimension_semantics=("parallel",),       # batch axis: independent -> megacore
    vmem_limit_bytes=32 * 1024 * 1024,
)


# ---------------- plain-JAX helpers (run once per call, outside the grid) ----------------

def _fake_quant(x, bits):
    """Symmetric per-tensor fake quantization (used for weights; hoisted out of kernels)."""
    qmax = float(2 ** (bits - 1) - 1)
    s = jnp.max(jnp.abs(x)) / qmax
    s = jnp.where(s == 0.0, 1.0, s)
    return jnp.clip(jnp.round(x / s), -qmax - 1.0, qmax) * s


def _pad_axis(a, axis, target):
    pad = [(0, 0)] * a.ndim
    pad[axis] = (0, target - a.shape[axis])
    return jnp.pad(a, pad)


def _act_scale(amax_partial):
    """Per-tensor activation-quant scale from the kernels' per-channel |max| side output."""
    s = jnp.max(amax_partial) / QMAX_A
    s = jnp.where(s == 0.0, 1.0, s)
    return s.reshape(1).astype(jnp.float32)


def im2col_3x3_s2(x):
    # x: (N, H, W, C) -> patches (N, Ho*Wo, 9*C), K-order = (kh, kw, cin)
    N, H, W, C = x.shape
    Ho, Wo = H // 2, W // 2
    xp = jnp.pad(x, ((0, 0), (1, 1), (1, 1), (0, 0)))
    cols = []
    for dh in range(3):
        for dw in range(3):
            cols.append(xp[:, dh:dh + 2 * Ho:2, dw:dw + 2 * Wo:2, :])
    patches = jnp.concatenate(cols, axis=-1)
    return patches.reshape(N, Ho * Wo, 9 * C)


# ---------------- in-kernel helpers ----------------

def _instance_norm(y, g, b):
    # ExpNorm2d modeled as per-sample, per-channel norm over the spatial (row) axis.
    mean = jnp.mean(y, axis=0, keepdims=True)
    var = jnp.mean(jnp.square(y - mean), axis=0, keepdims=True)
    return (y - mean) * jax.lax.rsqrt(var + EPS) * g + b


def _act_fake_quant(x, scale):
    # symmetric per-tensor activation fake-quant with a precomputed (SMEM) scale
    return jnp.clip(jnp.round(x * (1.0 / scale)), -QMAX_A - 1.0, QMAX_A) * scale


# ---------------- Pallas kernels (one sample per grid step) ----------------

def conv_norm_kernel(x_ref, w_ref, g_ref, b_ref, y_ref, amax_ref):
    # (M, K) @ (K, 128) -> ExpNorm -> lane-dense store + per-channel |max| stats
    y = jnp.dot(x_ref[...], w_ref[...], preferred_element_type=jnp.float32)
    out = _instance_norm(y, g_ref[...], b_ref[...])
    y_ref[...] = out
    amax_ref[...] = jnp.max(jnp.abs(out), axis=0, keepdims=True)


def quant_conv_norm_kernel(scale_ref, x_ref, w_ref, g_ref, b_ref, y_ref, amax_ref):
    # fused activation fake-quant + conv + ExpNorm + stats
    xq = _act_fake_quant(x_ref[...], scale_ref[0])
    y = jnp.dot(xq, w_ref[...], preferred_element_type=jnp.float32)
    out = _instance_norm(y, g_ref[...], b_ref[...])
    y_ref[...] = out
    amax_ref[...] = jnp.max(jnp.abs(out), axis=0, keepdims=True)


def quant_conv_norm_proj_add_kernel(scale_ref, x_ref, w_ref, g_ref, b_ref,
                                    xs_ref, wp_ref, gp_ref, bp_ref, o_ref):
    # main branch: act-quant + conv3(1x1) + ExpNorm
    xq = _act_fake_quant(x_ref[...], scale_ref[0])
    y3 = _instance_norm(
        jnp.dot(xq, w_ref[...], preferred_element_type=jnp.float32),
        g_ref[...], b_ref[...])
    # proj branch: 1x1 s2 conv (stride applied via strided slice in the wrapper) + ExpNorm
    yp = _instance_norm(
        jnp.dot(xs_ref[...], wp_ref[...], preferred_element_type=jnp.float32),
        gp_ref[...], bp_ref[...])
    # fused residual add -> no separate HBM round trip
    o_ref[...] = y3 + yp


# ---------------- pallas_call wrappers ----------------

def conv_norm(x, w, g, b):
    N, M, K = x.shape
    C = w.shape[1]
    return pl.pallas_call(
        conv_norm_kernel,
        out_shape=(jax.ShapeDtypeStruct((N, M, C), jnp.float32),
                   jax.ShapeDtypeStruct((N, 1, C), jnp.float32)),
        grid=(N,),
        in_specs=[
            pl.BlockSpec((None, M, K), lambda n: (n, 0, 0)),
            pl.BlockSpec((K, C), lambda n: (0, 0)),
            pl.BlockSpec((1, C), lambda n: (0, 0)),
            pl.BlockSpec((1, C), lambda n: (0, 0)),
        ],
        out_specs=(pl.BlockSpec((None, M, C), lambda n: (n, 0, 0)),
                   pl.BlockSpec((None, 1, C), lambda n: (n, 0, 0))),
        compiler_params=_COMPILER_PARAMS,
    )(x, w, g, b)


def quant_conv_norm(scale, x, w, g, b):
    N, M, K = x.shape
    C = w.shape[1]
    return pl.pallas_call(
        quant_conv_norm_kernel,
        out_shape=(jax.ShapeDtypeStruct((N, M, C), jnp.float32),
                   jax.ShapeDtypeStruct((N, 1, C), jnp.float32)),
        grid=(N,),
        in_specs=[
            pl.BlockSpec(memory_space=pltpu.MemorySpace.SMEM),   # (1,) act-quant scale
            pl.BlockSpec((None, M, K), lambda n: (n, 0, 0)),
            pl.BlockSpec((K, C), lambda n: (0, 0)),
            pl.BlockSpec((1, C), lambda n: (0, 0)),
            pl.BlockSpec((1, C), lambda n: (0, 0)),
        ],
        out_specs=(pl.BlockSpec((None, M, C), lambda n: (n, 0, 0)),
                   pl.BlockSpec((None, 1, C), lambda n: (n, 0, 0))),
        compiler_params=_COMPILER_PARAMS,
    )(scale, x, w, g, b)


def quant_conv_norm_proj_add(scale, x, w, g, b, xs, wp, gp, bp):
    N, M, K = x.shape
    C = w.shape[1]
    Ks = xs.shape[2]
    return pl.pallas_call(
        quant_conv_norm_proj_add_kernel,
        out_shape=jax.ShapeDtypeStruct((N, M, C), jnp.float32),
        grid=(N,),
        in_specs=[
            pl.BlockSpec(memory_space=pltpu.MemorySpace.SMEM),   # (1,) act-quant scale
            pl.BlockSpec((None, M, K), lambda n: (n, 0, 0)),
            pl.BlockSpec((K, C), lambda n: (0, 0)),
            pl.BlockSpec((1, C), lambda n: (0, 0)),
            pl.BlockSpec((1, C), lambda n: (0, 0)),
            pl.BlockSpec((None, M, Ks), lambda n: (n, 0, 0)),
            pl.BlockSpec((Ks, C), lambda n: (0, 0)),
            pl.BlockSpec((1, C), lambda n: (0, 0)),
            pl.BlockSpec((1, C), lambda n: (0, 0)),
        ],
        out_specs=pl.BlockSpec((None, M, C), lambda n: (n, 0, 0)),
        compiler_params=_COMPILER_PARAMS,
    )(scale, x, w, g, b, xs, wp, gp, bp)


# ---------------- forward pass ----------------

def qbottleneck_ins_forward(x, params):
    # x: (N, Cin, H, W) NCHW (PyTorch convention) -> (N, Cout, H//2, W//2)
    (w1, g1, b1, w2, g2, b2, w3, g3, b3, wp, gp, bp) = params
    xh = jnp.transpose(x, (0, 2, 3, 1)).astype(jnp.float32)          # NHWC
    N, H, W, Cin = xh.shape
    Ho, Wo = H // 2, W // 2
    neck = w1.shape[1]
    Cout = w3.shape[1]

    # --- hoisted weight fake-quant (grid-invariant) + zero-pad to 128 lanes ---
    w1q = _pad_axis(_fake_quant(w1, BIT_W), 1, LANES)                          # (Cin, 128)
    w2q = _pad_axis(_fake_quant(w2, BIT_W).reshape(9 * neck, neck), 1, LANES)  # (9*neck, 128)
    w3q = _pad_axis(_pad_axis(_fake_quant(w3, BIT_W), 0, LANES), 1, LANES)     # (128, 128)
    wpq = _pad_axis(_fake_quant(wp, BIT_W), 1, LANES)                          # (Cin, 128)
    g1p, b1p = _pad_axis(g1, 1, LANES), _pad_axis(b1, 1, LANES)
    g2p, b2p = _pad_axis(g2, 1, LANES), _pad_axis(b2, 1, LANES)
    g3p, b3p = _pad_axis(g3, 1, LANES), _pad_axis(b3, 1, LANES)
    gpp, bpp = _pad_axis(gp, 1, LANES), _pad_axis(bp, 1, LANES)

    # layers[0:2]: 1x1 QConv Cin->neck + ExpNorm (+ |max| stats for layers[2] quant)
    x1 = xh.reshape(N, H * W, Cin)
    y1, amax1 = conv_norm(x1, w1q, g1p, b1p)                 # (N, HW, 128)
    s1 = _act_scale(amax1)                                   # layers[2] act-quant scale

    # layers[3:5]: act-quant + 3x3 s2 p1 QConv neck->neck + ExpNorm (+ stats)
    # fake-quant commutes with the im2col gather, and quant(0)==0 for the padding,
    # so the quant is applied in-kernel to the patches instead of a full y1 pass.
    p2 = im2col_3x3_s2(y1[:, :, :neck].reshape(N, H, W, neck))   # (N, Ho*Wo, 9*neck)
    y2, amax2 = quant_conv_norm(s1, p2, w2q, g2p, b2p)           # (N, Ho*Wo, 128)
    s2 = _act_scale(amax2)                                       # layers[5] act-quant scale

    # layers[6:8] + proj(1x1 s2 + ExpNorm) + residual add, fused in one kernel
    xs = xh[:, ::2, ::2, :].reshape(N, Ho * Wo, Cin)
    out = quant_conv_norm_proj_add(s2, y2, w3q, g3p, b3p, xs, wpq, gpp, bpp)

    out = out[:, :, :Cout].reshape(N, Ho, Wo, Cout)
    return jnp.transpose(out, (0, 3, 1, 2))                      # back to NCHW


if __name__ == "__main__":
    key = jax.random.PRNGKey(0)
    N, Cin, H, W = 2, 8, 16, 16
    Cout = 16
    neck = Cout // 4  # neck_reduction = 4

    ks = jax.random.split(key, 16)
    x = jax.random.normal(ks[0], (N, Cin, H, W), jnp.float32)

    # deterministic parameter init (shapes from the module's __init__)
    w1 = 0.1 * jax.random.normal(ks[1], (Cin, neck), jnp.float32)          # 1x1
    g1 = 1.0 + 0.1 * jax.random.normal(ks[2], (1, neck), jnp.float32)
    b1 = 0.1 * jax.random.normal(ks[3], (1, neck), jnp.float32)
    w2 = 0.1 * jax.random.normal(ks[4], (3, 3, neck, neck), jnp.float32)   # 3x3 s2
    g2 = 1.0 + 0.1 * jax.random.normal(ks[5], (1, neck), jnp.float32)
    b2 = 0.1 * jax.random.normal(ks[6], (1, neck), jnp.float32)
    w3 = 0.1 * jax.random.normal(ks[7], (neck, Cout), jnp.float32)         # 1x1
    g3 = 1.0 + 0.1 * jax.random.normal(ks[8], (1, Cout), jnp.float32)
    b3 = 0.1 * jax.random.normal(ks[9], (1, Cout), jnp.float32)
    wp = 0.1 * jax.random.normal(ks[10], (Cin, Cout), jnp.float32)         # proj 1x1 s2
    gp = 1.0 + 0.1 * jax.random.normal(ks[11], (1, Cout), jnp.float32)
    bp = 0.1 * jax.random.normal(ks[12], (1, Cout), jnp.float32)

    params = (w1, g1, b1, w2, g2, b2, w3, g3, b3, wp, gp, bp)

    out = jax.jit(qbottleneck_ins_forward)(x, params)
    out = jax.block_until_ready(out)
    assert out.shape == (N, Cout, H // 2, W // 2), out.shape
    assert bool(jnp.all(jnp.isfinite(out)))
    print("KERNEL_OK")
</pallas_src>

<mosaic_0001>
module attributes {stable_mosaic.version = 11 : i64} {
  func.func @conv_norm_kernel(%arg0: i32, %arg1: memref<1x256x8xf32, #tpu.memory_space<vmem>>, %arg2: memref<8x128xf32, #tpu.memory_space<vmem>>, %arg3: memref<1x128xf32, #tpu.memory_space<vmem>>, %arg4: memref<1x128xf32, #tpu.memory_space<vmem>>, %arg5: memref<1x256x128xf32, #tpu.memory_space<vmem>>, %arg6: memref<1x1x128xf32, #tpu.memory_space<vmem>>) attributes {dimension_semantics = [#tpu.dimension_semantics<parallel>], iteration_bounds = array<i64: 2>, scalar_prefetch = 0 : i64, scratch_operands = 0 : i64, tpu.core_type = #tpu.core_type<tc>, window_params = [{transform_indices = @transform_0, window_bounds = array<i64: 1, 256, 8>}, {pipeline_mode = #tpu.pipeline_mode<synchronous>, transform_indices = @transform_1, window_bounds = array<i64: 8, 128>}, {pipeline_mode = #tpu.pipeline_mode<synchronous>, transform_indices = @transform_2, window_bounds = array<i64: 1, 128>}, {pipeline_mode = #tpu.pipeline_mode<synchronous>, transform_indices = @transform_3, window_bounds = array<i64: 1, 128>}, {transform_indices = @transform_4, window_bounds = array<i64: 1, 256, 128>}, {transform_indices = @transform_5, window_bounds = array<i64: 1, 1, 128>}]} {
    %c0 = arith.constant 0 : index
    %c0_0 = arith.constant 0 : index
    %c0_1 = arith.constant 0 : index
    %0 = vector.load %arg1[%c0, %c0_0, %c0_1] : memref<1x256x8xf32, #tpu.memory_space<vmem>>, vector<1x256x8xf32>
    %1 = vector.shape_cast %0 : vector<1x256x8xf32> to vector<256x8xf32>
    %c0_2 = arith.constant 0 : index
    %c0_3 = arith.constant 0 : index
    %2 = vector.load %arg2[%c0_2, %c0_3] : memref<8x128xf32, #tpu.memory_space<vmem>>, vector<8x128xf32>
    %cst = arith.constant dense<0.000000e+00> : vector<256x128xf32>
    %3 = tpu.matmul %1, %2, %cst {dimension_numbers = #tpu.dot_dimension_numbers<[1], [0], [0], [1], [0, 0, 1, 1], [], []>} : vector<256x8xf32>, vector<8x128xf32>, vector<256x128xf32> -> vector<256x128xf32>
    %c0_4 = arith.constant 0 : index
    %c0_5 = arith.constant 0 : index
    %4 = vector.load %arg3[%c0_4, %c0_5] : memref<1x128xf32, #tpu.memory_space<vmem>>, vector<1x128xf32>
    %c0_6 = arith.constant 0 : index
    %c0_7 = arith.constant 0 : index
    %5 = vector.load %arg4[%c0_6, %c0_7] : memref<1x128xf32, #tpu.memory_space<vmem>>, vector<1x128xf32>
    %cst_8 = arith.constant dense<0.000000e+00> : vector<128xf32>
    %6 = vector.multi_reduction <add>, %3, %cst_8 [0] : vector<256x128xf32> to vector<128xf32>
    %7 = vector.shape_cast %6 : vector<128xf32> to vector<1x128xf32>
    %cst_9 = arith.constant 2.560000e+02 : f32
    %8 = vector.broadcast %cst_9 : f32 to vector<1x128xf32>
    %9 = arith.divf %7, %8 : vector<1x128xf32>
    %10 = vector.broadcast %9 : vector<1x128xf32> to vector<256x128xf32>
    %11 = arith.subf %3, %10 : vector<256x128xf32>
    %12 = arith.mulf %11, %11 : vector<256x128xf32>
    %cst_10 = arith.constant dense<0.000000e+00> : vector<128xf32>
    %13 = vector.multi_reduction <add>, %12, %cst_10 [0] : vector<256x128xf32> to vector<128xf32>
    %14 = vector.shape_cast %13 : vector<128xf32> to vector<1x128xf32>
    %cst_11 = arith.constant 2.560000e+02 : f32
    %15 = vector.broadcast %cst_11 : f32 to vector<1x128xf32>
    %16 = arith.divf %14, %15 : vector<1x128xf32>
    %17 = vector.broadcast %9 : vector<1x128xf32> to vector<256x128xf32>
    %18 = arith.subf %3, %17 : vector<256x128xf32>
    %cst_12 = arith.constant 9.99999974E-6 : f32
    %19 = vector.broadcast %cst_12 : f32 to vector<1x128xf32>
    %20 = arith.addf %16, %19 : vector<1x128xf32>
    %21 = math.rsqrt %20 : vector<1x128xf32>
    %22 = vector.broadcast %21 : vector<1x128xf32> to vector<256x128xf32>
    %23 = arith.mulf %18, %22 : vector<256x128xf32>
    %24 = vector.broadcast %4 : vector<1x128xf32> to vector<256x128xf32>
    %25 = arith.mulf %23, %24 : vector<256x128xf32>
    %26 = vector.broadcast %5 : vector<1x128xf32> to vector<256x128xf32>
    %27 = arith.addf %25, %26 : vector<256x128xf32>
    %c0_13 = arith.constant 0 : index
    %c0_14 = arith.constant 0 : index
    %c0_15 = arith.constant 0 : index
    %28 = vector.load %arg5[%c0_13, %c0_14, %c0_15] : memref<1x256x128xf32, #tpu.memory_space<vmem>>, vector<1x256x128xf32>
    %29 = vector.shape_cast %28 : vector<1x256x128xf32> to vector<256x128xf32>
    %30 = vector.shape_cast %27 : vector<256x128xf32> to vector<1x256x128xf32>
    tpu.vector_store %arg5[%c0_13, %c0_14, %c0_15], %30 {strides = array<i32>} : memref<1x256x128xf32, #tpu.memory_space<vmem>>, vector<1x256x128xf32>,
    %31 = math.absf %27 : vector<256x128xf32>
    %cst_16 = arith.constant dense<0xFF800000> : vector<128xf32>
    %32 = vector.multi_reduction <maximumf>, %31, %cst_16 [0] : vector<256x128xf32> to vector<128xf32>
    %33 = vector.shape_cast %32 : vector<128xf32> to vector<1x128xf32>
    %c0_17 = arith.constant 0 : index
    %c0_18 = arith.constant 0 : index
    %c0_19 = arith.constant 0 : index
    %34 = vector.load %arg6[%c0_17, %c0_18, %c0_19] : memref<1x1x128xf32, #tpu.memory_space<vmem>>, vector<1x1x128xf32>
    %35 = vector.shape_cast %34 : vector<1x1x128xf32> to vector<1x128xf32>
    %36 = vector.shape_cast %33 : vector<1x128xf32> to vector<1x1x128xf32>
    tpu.vector_store %arg6[%c0_17, %c0_18, %c0_19], %36 {strides = array<i32>} : memref<1x1x128xf32, #tpu.memory_space<vmem>>, vector<1x1x128xf32>,
    return
  }
  func.func @transform_0(%arg0: i32) -> (i32, i32, i32) {
    %c0_i32 = arith.constant 0 : i32
    %c0_i32_0 = arith.constant 0 : i32
    %c0_i32_1 = arith.constant 0 : i32
    return %arg0, %c0_i32, %c0_i32_0 : i32, i32, i32
  }
  func.func @transform_1(%arg0: i32) -> (i32, i32) {
    %c0_i32 = arith.constant 0 : i32
    %c0_i32_0 = arith.constant 0 : i32
    %c0_i32_1 = arith.constant 0 : i32
    return %c0_i32, %c0_i32_0 : i32, i32
  }
  func.func @transform_2(%arg0: i32) -> (i32, i32) {
    %c0_i32 = arith.constant 0 : i32
    %c0_i32_0 = arith.constant 0 : i32
    %c0_i32_1 = arith.constant 0 : i32
    return %c0_i32, %c0_i32_0 : i32, i32
  }
  func.func @transform_3(%arg0: i32) -> (i32, i32) {
    %c0_i32 = arith.constant 0 : i32
    %c0_i32_0 = arith.constant 0 : i32
    %c0_i32_1 = arith.constant 0 : i32
    return %c0_i32, %c0_i32_0 : i32, i32
  }
  func.func @transform_4(%arg0: i32) -> (i32, i32, i32) {
    %c0_i32 = arith.constant 0 : i32
    %c0_i32_0 = arith.constant 0 : i32
    %c0_i32_1 = arith.constant 0 : i32
    return %arg0, %c0_i32, %c0_i32_0 : i32, i32, i32
  }
  func.func @transform_5(%arg0: i32) -> (i32, i32, i32) {
    %c0_i32 = arith.constant 0 : i32
    %c0_i32_0 = arith.constant 0 : i32
    %c0_i32_1 = arith.constant 0 : i32
    return %arg0, %c0_i32, %c0_i32_0 : i32, i32, i32
  }
}

module attributes {stable_mosaic.version = 11 : i64} {
  func.func @quant_conv_norm_kernel(%arg0: i32, %arg1: memref<1xf32, #tpu.memory_space<smem>>, %arg2: memref<1x64x36xf32, #tpu.memory_space<vmem>>, %arg3: memref<36x128xf32, #tpu.memory_space<vmem>>, %arg4: memref<1x128xf32, #tpu.memory_space<vmem>>, %arg5: memref<1x128xf32, #tpu.memory_space<vmem>>, %arg6: memref<1x64x128xf32, #tpu.memory_space<vmem>>, %arg7: memref<1x1x128xf32, #tpu.memory_space<vmem>>) attributes {dimension_semantics = [#tpu.dimension_semantics<parallel>], iteration_bounds = array<i64: 2>, scalar_prefetch = 0 : i64, scratch_operands = 0 : i64, tpu.core_type = #tpu.core_type<tc>, window_params = [{transform_indices = @transform_0, window_bounds = array<i64: 1>}, {transform_indices = @transform_1, window_bounds = array<i64: 1, 64, 36>}, {pipeline_mode = #tpu.pipeline_mode<synchronous>, transform_indices = @transform_2, window_bounds = array<i64: 36, 128>}, {pipeline_mode = #tpu.pipeline_mode<synchronous>, transform_indices = @transform_3, window_bounds = array<i64: 1, 128>}, {pipeline_mode = #tpu.pipeline_mode<synchronous>, transform_indices = @transform_4, window_bounds = array<i64: 1, 128>}, {transform_indices = @transform_5, window_bounds = array<i64: 1, 64, 128>}, {transform_indices = @transform_6, window_bounds = array<i64: 1, 1, 128>}]} {
    %c0 = arith.constant 0 : index
    %c0_0 = arith.constant 0 : index
    %c0_1 = arith.constant 0 : index
    %0 = vector.load %arg2[%c0, %c0_0, %c0_1] : memref<1x64x36xf32, #tpu.memory_space<vmem>>, vector<1x64x36xf32>
    %1 = vector.shape_cast %0 : vector<1x64x36xf32> to vector<64x36xf32>
    %c0_2 = arith.constant 0 : index
    %2 = memref.load %arg1[%c0_2] : memref<1xf32, #tpu.memory_space<smem>>
    %cst = arith.constant 1.000000e+00 : f32
    %3 = arith.divf %cst, %2 : f32
    %4 = vector.broadcast %3 : f32 to vector<64x36xf32>
    %5 = arith.mulf %1, %4 : vector<64x36xf32>
    %6 = math.roundeven %5 : vector<64x36xf32>
    %cst_3 = arith.constant -1.280000e+02 : f32
    %cst_4 = arith.constant 1.270000e+02 : f32
    %7 = vector.broadcast %cst_3 : f32 to vector<64x36xf32>
    %8 = arith.maximumf %7, %6 : vector<64x36xf32>
    %9 = vector.broadcast %cst_4 : f32 to vector<64x36xf32>
    %10 = arith.minimumf %9, %8 : vector<64x36xf32>
    %11 = vector.broadcast %2 : f32 to vector<64x36xf32>
    %12 = arith.mulf %10, %11 : vector<64x36xf32>
    %c0_5 = arith.constant 0 : index
    %c0_6 = arith.constant 0 : index
    %13 = vector.load %arg3[%c0_5, %c0_6] : memref<36x128xf32, #tpu.memory_space<vmem>>, vector<36x128xf32>
    %cst_7 = arith.constant dense<0.000000e+00> : vector<64x128xf32>
    %14 = tpu.matmul %12, %13, %cst_7 {dimension_numbers = #tpu.dot_dimension_numbers<[1], [0], [0], [1], [0, 0, 1, 1], [], []>} : vector<64x36xf32>, vector<36x128xf32>, vector<64x128xf32> -> vector<64x128xf32>
    %c0_8 = arith.constant 0 : index
    %c0_9 = arith.constant 0 : index
    %15 = vector.load %arg4[%c0_8, %c0_9] : memref<1x128xf32, #tpu.memory_space<vmem>>, vector<1x128xf32>
    %c0_10 = arith.constant 0 : index
    %c0_11 = arith.constant 0 : index
    %16 = vector.load %arg5[%c0_10, %c0_11] : memref<1x128xf32, #tpu.memory_space<vmem>>, vector<1x128xf32>
    %cst_12 = arith.constant dense<0.000000e+00> : vector<128xf32>
    %17 = vector.multi_reduction <add>, %14, %cst_12 [0] : vector<64x128xf32> to vector<128xf32>
    %18 = vector.shape_cast %17 : vector<128xf32> to vector<1x128xf32>
    %cst_13 = arith.constant 6.400000e+01 : f32
    %19 = vector.broadcast %cst_13 : f32 to vector<1x128xf32>
    %20 = arith.divf %18, %19 : vector<1x128xf32>
    %21 = vector.broadcast %20 : vector<1x128xf32> to vector<64x128xf32>
    %22 = arith.subf %14, %21 : vector<64x128xf32>
    %23 = arith.mulf %22, %22 : vector<64x128xf32>
    %cst_14 = arith.constant dense<0.000000e+00> : vector<128xf32>
    %24 = vector.multi_reduction <add>, %23, %cst_14 [0] : vector<64x128xf32> to vector<128xf32>
    %25 = vector.shape_cast %24 : vector<128xf32> to vector<1x128xf32>
    %cst_15 = arith.constant 6.400000e+01 : f32
    %26 = vector.broadcast %cst_15 : f32 to vector<1x128xf32>
    %27 = arith.divf %25, %26 : vector<1x128xf32>
    %28 = vector.broadcast %20 : vector<1x128xf32> to vector<64x128xf32>
    %29 = arith.subf %14, %28 : vector<64x128xf32>
    %cst_16 = arith.constant 9.99999974E-6 : f32
    %30 = vector.broadcast %cst_16 : f32 to vector<1x128xf32>
    %31 = arith.addf %27, %30 : vector<1x128xf32>
    %32 = math.rsqrt %31 : vector<1x128xf32>
    %33 = vector.broadcast %32 : vector<1x128xf32> to vector<64x128xf32>
    %34 = arith.mulf %29, %33 : vector<64x128xf32>
    %35 = vector.broadcast %15 : vector<1x128xf32> to vector<64x128xf32>
    %36 = arith.mulf %34, %35 : vector<64x128xf32>
    %37 = vector.broadcast %16 : vector<1x128xf32> to vector<64x128xf32>
    %38 = arith.addf %36, %37 : vector<64x128xf32>
    %c0_17 = arith.constant 0 : index
    %c0_18 = arith.constant 0 : index
    %c0_19 = arith.constant 0 : index
    %39 = vector.load %arg6[%c0_17, %c0_18, %c0_19] : memref<1x64x128xf32, #tpu.memory_space<vmem>>, vector<1x64x128xf32>
    %40 = vector.shape_cast %39 : vector<1x64x128xf32> to vector<64x128xf32>
    %41 = vector.shape_cast %38 : vector<64x128xf32> to vector<1x64x128xf32>
    tpu.vector_store %arg6[%c0_17, %c0_18, %c0_19], %41 {strides = array<i32>} : memref<1x64x128xf32, #tpu.memory_space<vmem>>, vector<1x64x128xf32>,
    %42 = math.absf %38 : vector<64x128xf32>
    %cst_20 = arith.constant dense<0xFF800000> : vector<128xf32>
    %43 = vector.multi_reduction <maximumf>, %42, %cst_20 [0] : vector<64x128xf32> to vector<128xf32>
    %44 = vector.shape_cast %43 : vector<128xf32> to vector<1x128xf32>
    %c0_21 = arith.constant 0 : index
    %c0_22 = arith.constant 0 : index
    %c0_23 = arith.constant 0 : index
    %45 = vector.load %arg7[%c0_21, %c0_22, %c0_23] : memref<1x1x128xf32, #tpu.memory_space<vmem>>, vector<1x1x128xf32>
    %46 = vector.shape_cast %45 : vector<1x1x128xf32> to vector<1x128xf32>
    %47 = vector.shape_cast %44 : vector<1x128xf32> to vector<1x1x128xf32>
    tpu.vector_store %arg7[%c0_21, %c0_22, %c0_23], %47 {strides = array<i32>} : memref<1x1x128xf32, #tpu.memory_space<vmem>>, vector<1x1x128xf32>,
    return
  }
  func.func @transform_0(%arg0: i32) -> i32 {
    %c0_i32 = arith.constant 0 : i32
    %c0_i32_0 = arith.constant 0 : i32
    return %c0_i32 : i32
  }
  func.func @transform_1(%arg0: i32) -> (i32, i32, i32) {
    %c0_i32 = arith.constant 0 : i32
    %c0_i32_0 = arith.constant 0 : i32
    %c0_i32_1 = arith.constant 0 : i32
    return %arg0, %c0_i32, %c0_i32_0 : i32, i32, i32
  }
  func.func @transform_2(%arg0: i32) -> (i32, i32) {
    %c0_i32 = arith.constant 0 : i32
    %c0_i32_0 = arith.constant 0 : i32
    %c0_i32_1 = arith.constant 0 : i32
    return %c0_i32, %c0_i32_0 : i32, i32
  }
  func.func @transform_3(%arg0: i32) -> (i32, i32) {
    %c0_i32 = arith.constant 0 : i32
    %c0_i32_0 = arith.constant 0 : i32
    %c0_i32_1 = arith.constant 0 : i32
    return %c0_i32, %c0_i32_0 : i32, i32
  }
  func.func @transform_4(%arg0: i32) -> (i32, i32) {
    %c0_i32 = arith.constant 0 : i32
    %c0_i32_0 = arith.constant 0 : i32
    %c0_i32_1 = arith.constant 0 : i32
    return %c0_i32, %c0_i32_0 : i32, i32
  }
  func.func @transform_5(%arg0: i32) -> (i32, i32, i32) {
    %c0_i32 = arith.constant 0 : i32
    %c0_i32_0 = arith.constant 0 : i32
    %c0_i32_1 = arith.constant 0 : i32
    return %arg0, %c0_i32, %c0_i32_0 : i32, i32, i32
  }
  func.func @transform_6(%arg0: i32) -> (i32, i32, i32) {
    %c0_i32 = arith.constant 0 : i32
    %c0_i32_0 = arith.constant 0 : i32
    %c0_i32_1 = arith.constant 0 : i32
    return %arg0, %c0_i32, %c0_i32_0 : i32, i32, i32
  }
}

module attributes {stable_mosaic.version = 11 : i64} {
  func.func @quant_conv_norm_proj_add_kernel(%arg0: i32, %arg1: memref<1xf32, #tpu.memory_space<smem>>, %arg2: memref<1x64x128xf32, #tpu.memory_space<vmem>>, %arg3: memref<128x128xf32, #tpu.memory_space<vmem>>, %arg4: memref<1x128xf32, #tpu.memory_space<vmem>>, %arg5: memref<1x128xf32, #tpu.memory_space<vmem>>, %arg6: memref<1x64x8xf32, #tpu.memory_space<vmem>>, %arg7: memref<8x128xf32, #tpu.memory_space<vmem>>, %arg8: memref<1x128xf32, #tpu.memory_space<vmem>>, %arg9: memref<1x128xf32, #tpu.memory_space<vmem>>, %arg10: memref<1x64x128xf32, #tpu.memory_space<vmem>>) attributes {dimension_semantics = [#tpu.dimension_semantics<parallel>], iteration_bounds = array<i64: 2>, scalar_prefetch = 0 : i64, scratch_operands = 0 : i64, tpu.core_type = #tpu.core_type<tc>, window_params = [{transform_indices = @transform_0, window_bounds = array<i64: 1>}, {transform_indices = @transform_1, window_bounds = array<i64: 1, 64, 128>}, {pipeline_mode = #tpu.pipeline_mode<synchronous>, transform_indices = @transform_2, window_bounds = array<i64: 128, 128>}, {pipeline_mode = #tpu.pipeline_mode<synchronous>, transform_indices = @transform_3, window_bounds = array<i64: 1, 128>}, {pipeline_mode = #tpu.pipeline_mode<synchronous>, transform_indices = @transform_4, window_bounds = array<i64: 1, 128>}, {transform_indices = @transform_5, window_bounds = array<i64: 1, 64, 8>}, {pipeline_mode = #tpu.pipeline_mode<synchronous>, transform_indices = @transform_6, window_bounds = array<i64: 8, 128>}, {pipeline_mode = #tpu.pipeline_mode<synchronous>, transform_indices = @transform_7, window_bounds = array<i64: 1, 128>}, {pipeline_mode = #tpu.pipeline_mode<synchronous>, transform_indices = @transform_8, window_bounds = array<i64: 1, 128>}, {transform_indices = @transform_9, window_bounds = array<i64: 1, 64, 128>}]} {
    %c0 = arith.constant 0 : index
    %c0_0 = arith.constant 0 : index
    %c0_1 = arith.constant 0 : index
    %0 = vector.load %arg2[%c0, %c0_0, %c0_1] : memref<1x64x128xf32, #tpu.memory_space<vmem>>, vector<1x64x128xf32>
    %1 = vector.shape_cast %0 : vector<1x64x128xf32> to vector<64x128xf32>
    %c0_2 = arith.constant 0 : index
    %2 = memref.load %arg1[%c0_2] : memref<1xf32, #tpu.memory_space<smem>>
    %cst = arith.constant 1.000000e+00 : f32
    %3 = arith.divf %cst, %2 : f32
    %4 = vector.broadcast %3 : f32 to vector<64x128xf32>
    %5 = arith.mulf %1, %4 : vector<64x128xf32>
    %6 = math.roundeven %5 : vector<64x128xf32>
    %cst_3 = arith.constant -1.280000e+02 : f32
    %cst_4 = arith.constant 1.270000e+02 : f32
    %7 = vector.broadcast %cst_3 : f32 to vector<64x128xf32>
    %8 = arith.maximumf %7, %6 : vector<64x128xf32>
    %9 = vector.broadcast %cst_4 : f32 to vector<64x128xf32>
    %10 = arith.minimumf %9, %8 : vector<64x128xf32>
    %11 = vector.broadcast %2 : f32 to vector<64x128xf32>
    %12 = arith.mulf %10, %11 : vector<64x128xf32>
    %c0_5 = arith.constant 0 : index
    %c0_6 = arith.constant 0 : index
    %13 = vector.load %arg3[%c0_5, %c0_6] : memref<128x128xf32, #tpu.memory_space<vmem>>, vector<128x128xf32>
    %cst_7 = arith.constant dense<0.000000e+00> : vector<64x128xf32>
    %14 = tpu.matmul %12, %13, %cst_7 {dimension_numbers = #tpu.dot_dimension_numbers<[1], [0], [0], [1], [0, 0, 1, 1], [], []>} : vector<64x128xf32>, vector<128x128xf32>, vector<64x128xf32> -> vector<64x128xf32>
    %c0_8 = arith.constant 0 : index
    %c0_9 = arith.constant 0 : index
    %15 = vector.load %arg4[%c0_8, %c0_9] : memref<1x128xf32, #tpu.memory_space<vmem>>, vector<1x128xf32>
    %c0_10 = arith.constant 0 : index
    %c0_11 = arith.constant 0 : index
    %16 = vector.load %arg5[%c0_10, %c0_11] : memref<1x128xf32, #tpu.memory_space<vmem>>, vector<1x128xf32>
    %cst_12 = arith.constant dense<0.000000e+00> : vector<128xf32>
    %17 = vector.multi_reduction <add>, %14, %cst_12 [0] : vector<64x128xf32> to vector<128xf32>
    %18 = vector.shape_cast %17 : vector<128xf32> to vector<1x128xf32>
    %cst_13 = arith.constant 6.400000e+01 : f32
    %19 = vector.broadcast %cst_13 : f32 to vector<1x128xf32>
    %20 = arith.divf %18, %19 : vector<1x128xf32>
    %21 = vector.broadcast %20 : vector<1x128xf32> to vector<64x128xf32>
    %22 = arith.subf %14, %21 : vector<64x128xf32>
    %23 = arith.mulf %22, %22 : vector<64x128xf32>
    %cst_14 = arith.constant dense<0.000000e+00> : vector<128xf32>
    %24 = vector.multi_reduction <add>, %23, %cst_14 [0] : vector<64x128xf32> to vector<128xf32>
    %25 = vector.shape_cast %24 : vector<128xf32> to vector<1x128xf32>
    %cst_15 = arith.constant 6.400000e+01 : f32
    %26 = vector.broadcast %cst_15 : f32 to vector<1x128xf32>
    %27 = arith.divf %25, %26 : vector<1x128xf32>
    %28 = vector.broadcast %20 : vector<1x128xf32> to vector<64x128xf32>
    %29 = arith.subf %14, %28 : vector<64x128xf32>
    %cst_16 = arith.constant 9.99999974E-6 : f32
    %30 = vector.broadcast %cst_16 : f32 to vector<1x128xf32>
    %31 = arith.addf %27, %30 : vector<1x128xf32>
    %32 = math.rsqrt %31 : vector<1x128xf32>
    %33 = vector.broadcast %32 : vector<1x128xf32> to vector<64x128xf32>
    %34 = arith.mulf %29, %33 : vector<64x128xf32>
    %35 = vector.broadcast %15 : vector<1x128xf32> to vector<64x128xf32>
    %36 = arith.mulf %34, %35 : vector<64x128xf32>
    %37 = vector.broadcast %16 : vector<1x128xf32> to vector<64x128xf32>
    %38 = arith.addf %36, %37 : vector<64x128xf32>
    %c0_17 = arith.constant 0 : index
    %c0_18 = arith.constant 0 : index
    %c0_19 = arith.constant 0 : index
    %39 = vector.load %arg6[%c0_17, %c0_18, %c0_19] : memref<1x64x8xf32, #tpu.memory_space<vmem>>, vector<1x64x8xf32>
    %40 = vector.shape_cast %39 : vector<1x64x8xf32> to vector<64x8xf32>
    %c0_20 = arith.constant 0 : index
    %c0_21 = arith.constant 0 : index
    %41 = vector.load %arg7[%c0_20, %c0_21] : memref<8x128xf32, #tpu.memory_space<vmem>>, vector<8x128xf32>
    %cst_22 = arith.constant dense<0.000000e+00> : vector<64x128xf32>
    %42 = tpu.matmul %40, %41, %cst_22 {dimension_numbers = #tpu.dot_dimension_numbers<[1], [0], [0], [1], [0, 0, 1, 1], [], []>} : vector<64x8xf32>, vector<8x128xf32>, vector<64x128xf32> -> vector<64x128xf32>
    %c0_23 = arith.constant 0 : index
    %c0_24 = arith.constant 0 : index
    %43 = vector.load %arg8[%c0_23, %c0_24] : memref<1x128xf32, #tpu.memory_space<vmem>>, vector<1x128xf32>
    %c0_25 = arith.constant 0 : index
    %c0_26 = arith.constant 0 : index
    %44 = vector.load %arg9[%c0_25, %c0_26] : memref<1x128xf32, #tpu.memory_space<vmem>>, vector<1x128xf32>
    %cst_27 = arith.constant dense<0.000000e+00> : vector<128xf32>
    %45 = vector.multi_reduction <add>, %42, %cst_27 [0] : vector<64x128xf32> to vector<128xf32>
    %46 = vector.shape_cast %45 : vector<128xf32> to vector<1x128xf32>
    %cst_28 = arith.constant 6.400000e+01 : f32
    %47 = vector.broadcast %cst_28 : f32 to vector<1x128xf32>
    %48 = arith.divf %46, %47 : vector<1x128xf32>
    %49 = vector.broadcast %48 : vector<1x128xf32> to vector<64x128xf32>
    %50 = arith.subf %42, %49 : vector<64x128xf32>
    %51 = arith.mulf %50, %50 : vector<64x128xf32>
    %cst_29 = arith.constant dense<0.000000e+00> : vector<128xf32>
    %52 = vector.multi_reduction <add>, %51, %cst_29 [0] : vector<64x128xf32> to vector<128xf32>
    %53 = vector.shape_cast %52 : vector<128xf32> to vector<1x128xf32>
    %cst_30 = arith.constant 6.400000e+01 : f32
    %54 = vector.broadcast %cst_30 : f32 to vector<1x128xf32>
    %55 = arith.divf %53, %54 : vector<1x128xf32>
    %56 = vector.broadcast %48 : vector<1x128xf32> to vector<64x128xf32>
    %57 = arith.subf %42, %56 : vector<64x128xf32>
    %cst_31 = arith.constant 9.99999974E-6 : f32
    %58 = vector.broadcast %cst_31 : f32 to vector<1x128xf32>
    %59 = arith.addf %55, %58 : vector<1x128xf32>
    %60 = math.rsqrt %59 : vector<1x128xf32>
    %61 = vector.broadcast %60 : vector<1x128xf32> to vector<64x128xf32>
    %62 = arith.mulf %57, %61 : vector<64x128xf32>
    %63 = vector.broadcast %43 : vector<1x128xf32> to vector<64x128xf32>
    %64 = arith.mulf %62, %63 : vector<64x128xf32>
    %65 = vector.broadcast %44 : vector<1x128xf32> to vector<64x128xf32>
    %66 = arith.addf %64, %65 : vector<64x128xf32>
    %67 = arith.addf %38, %66 : vector<64x128xf32>
    %c0_32 = arith.constant 0 : index
    %c0_33 = arith.constant 0 : index
    %c0_34 = arith.constant 0 : index
    %68 = vector.load %arg10[%c0_32, %c0_33, %c0_34] : memref<1x64x128xf32, #tpu.memory_space<vmem>>, vector<1x64x128xf32>
    %69 = vector.shape_cast %68 : vector<1x64x128xf32> to vector<64x128xf32>
    %70 = vector.shape_cast %67 : vector<64x128xf32> to vector<1x64x128xf32>
    tpu.vector_store %arg10[%c0_32, %c0_33, %c0_34], %70 {strides = array<i32>} : memref<1x64x128xf32, #tpu.memory_space<vmem>>, vector<1x64x128xf32>,
    return
  }
  func.func @transform_0(%arg0: i32) -> i32 {
    %c0_i32 = arith.constant 0 : i32
    %c0_i32_0 = arith.constant 0 : i32
    return %c0_i32 : i32
  }
  func.func @transform_1(%arg0: i32) -> (i32, i32, i32) {
    %c0_i32 = arith.constant 0 : i32
    %c0_i32_0 = arith.constant 0 : i32
    %c0_i32_1 = arith.constant 0 : i32
    return %arg0, %c0_i32, %c0_i32_0 : i32, i32, i32
  }
  func.func @transform_2(%arg0: i32) -> (i32, i32) {
    %c0_i32 = arith.constant 0 : i32
    %c0_i32_0 = arith.constant 0 : i32
    %c0_i32_1 = arith.constant 0 : i32
    return %c0_i32, %c0_i32_0 : i32, i32
  }
  func.func @transform_3(%arg0: i32) -> (i32, i32) {
    %c0_i32 = arith.constant 0 : i32
    %c0_i32_0 = arith.constant 0 : i32
    %c0_i32_1 = arith.constant 0 : i32
    return %c0_i32, %c0_i32_0 : i32, i32
  }
  func.func @transform_4(%arg0: i32) -> (i32, i32) {
    %c0_i32 = arith.constant 0 : i32
    %c0_i32_0 = arith.constant 0 : i32
    %c0_i32_1 = arith.constant 0 : i32
    return %c0_i32, %c0_i32_0 : i32, i32
  }
  func.func @transform_5(%arg0: i32) -> (i32, i32, i32) {
    %c0_i32 = arith.constant 0 : i32
    %c0_i32_0 = arith.constant 0 : i32
    %c0_i32_1 = arith.constant 0 : i32
    return %arg0, %c0_i32, %c0_i32_0 : i32, i32, i32
  }
  func.func @transform_6(%arg0: i32) -> (i32, i32) {
    %c0_i32 = arith.constant 0 : i32
    %c0_i32_0 = arith.constant 0 : i32
    %c0_i32_1 = arith.constant 0 : i32
    return %c0_i32, %c0_i32_0 : i32, i32
  }
  func.func @transform_7(%arg0: i32) -> (i32, i32) {
    %c0_i32 = arith.constant 0 : i32
    %c0_i32_0 = arith.constant 0 : i32
    %c0_i32_1 = arith.constant 0 : i32
    return %c0_i32, %c0_i32_0 : i32, i32
  }
  func.func @transform_8(%arg0: i32) -> (i32, i32) {
    %c0_i32 = arith.constant 0 : i32
    %c0_i32_0 = arith.constant 0 : i32
    %c0_i32_1 = arith.constant 0 : i32
    return %c0_i32, %c0_i32_0 : i32, i32
  }
  func.func @transform_9(%arg0: i32) -> (i32, i32, i32) {
    %c0_i32 = arith.constant 0 : i32
    %c0_i32_0 = arith.constant 0 : i32
    %c0_i32_1 = arith.constant 0 : i32
    return %arg0, %c0_i32, %c0_i32_0 : i32, i32, i32
  }
}

</mosaic_0001>

<llo_original>
// kernel: qbottleneck_ins_forward.4
$region0: #{qbottleneck_ins_forward.4}
  #allocation0 [shape = 'u32[]', space=smem, size = 0x4, offset = 0x4, fixed_abs, tag = 'smem constant byte address 0x4 - core index']
  #allocation1 [shape = 'u32[144,128]{1,0:T(1,128)}', space=vmem, size = 0x12000, scoped, tag = 'internal scratch']
  #allocation2 [shape = 'f32[1]{0:T(128)S(6)}', space=smem, size = 0x200, scoped, tag = 'scoped memory for qbottleneck_ins_forward.4']
  %s0 = inlined_call_operand.<no memory space> [shape: f32[1], index: 0, kind: input, shape index: {}]
  %s1 = inlined_call_operand.vmem [shape: f32[2,64,36], index: 1, kind: input, shape index: {}]
  %s2 = inlined_call_operand.vmem [shape: f32[36,128], index: 2, kind: input, shape index: {}]
  %s3 = inlined_call_operand.vmem [shape: f32[1,128], index: 3, kind: input, shape index: {}]
  %s4 = inlined_call_operand.vmem [shape: f32[1,128], index: 4, kind: input, shape index: {}]
  %s5 = inlined_call_operand.vmem [shape: f32[2,64,128], index: 5, kind: output, shape index: {0}]
  %s6 = inlined_call_operand.vmem [shape: f32[2,1,128], index: 6, kind: output, shape index: {1}]
  %7 = xla_tuple %s5, %s6
  %s8 = sld [smem:[#allocation0]]
  $region61: #{qbottleneck_ins_forward.4} parent=0
    _
  %s10 = ssub.s32 1, %s8
  %s11 = scalar_select 0, %s10, %s8
  %12 = sst [smem:[#allocation2]] %s0
  loop: start=0, step=1, limit=4
  $region2: #{qbottleneck_ins_forward.4} parent=0 // loop_pre_header
    _
  $region3: #{qbottleneck_ins_forward.4} parent=0 // loop_header
    %s14 = sphi 0, %s18
    %p15 = scmp.ge.s32.totalorder %s14, 4
    %s22 = sphi 0, %s22
    %s24 = sphi 0, %s22
    %s25 = sphi 0, %s24
    %s39 = sphi 0, %s25
    %s45 = sphi 0, %s47
    %s48 = sphi 0, %s45
    %s49 = sphi 0, %s48
    %s65 = sphi 0, %s49
    %s69 = sphi 0, %s69
    %s71 = sphi 0, %s69
    %s72 = sphi 0, %s71
    %s86 = sphi 0, %s72
    %s90 = sphi 0, %s90
    %s92 = sphi 0, %s90
    %s93 = sphi 0, %s92
    %s107 = sphi 0, %s93
    %s111 = sphi 0, %s111
    %s113 = sphi 0, %s111
    %s114 = sphi 0, %s113
    %s128 = sphi 0, %s114
    %s134 = sphi 0, %s136
    %s137 = sphi 0, %s134
    %s138 = sphi 0, %s137
    %s154 = sphi 0, %s138
    %s160 = sphi 0, %s162
    %s163 = sphi 0, %s160
    %s164 = sphi 0, %s163
    %s180 = sphi 0, %s164
  $region4: #{qbottleneck_ins_forward.4} parent=0 // loop_header_branch
    %17 = sbr.rel (%p15) target = $region8
  $region5: #{qbottleneck_ins_forward.4} parent=0 // loop_body
    %s19 = ssub.s32 %s14, 1
    %s20 = ssub.s32 %s14, 2
    %s21 = sadd.s32 %s14, 1
    %s23 = sadd.s32 %s22, 1
    %p26 = scmp.eq.s32.totalorder %s14, 1
    %p27 = scmp.ne.s32.totalorder %s22, %s24
    %p28 = scmp.eq.s32.totalorder %s14, 0
    %p29 = por %p27, %p28
    %p30 = scmp.ne.s32.totalorder %s22, %s24
    %p31 = scmp.eq.s32.totalorder %s19, 1
    %p32 = por %p30, %p31
    %p33 = scmp.ne.s32.totalorder %s24, %s25
    %p34 = scmp.eq.s32.totalorder %s19, 0
    %p35 = por %p33, %p34
    %p36 = scmp.ne.s32.totalorder %s24, %s25
    %p37 = scmp.eq.s32.totalorder %s20, 1
    %p38 = por %p36, %p37
    %p40 = scmp.ne.s32.totalorder %s25, %s39
    %p41 = scmp.eq.s32.totalorder %s20, 0
    %p42 = por %p40, %p41
    %s43 = ssub.s32 %s14, %s21
    %p44 = scmp.eq.s32.totalorder %s43, 0
    %s46 = sadd.s32 %s45, 1
    %s47 = scalar_select %p44, %s45, %s46
    %p50 = pneg %p44
    %p51 = scmp.eq.s32.totalorder %s14, 1
    %p52 = por %p50, %p51
    %p53 = scmp.ne.s32.totalorder %s45, %s48
    %p54 = scmp.eq.s32.totalorder %s14, 0
    %p55 = por %p53, %p54
    %p56 = scmp.ne.s32.totalorder %s45, %s48
    %p57 = scmp.eq.s32.totalorder %s19, 1
    %p58 = por %p56, %p57
    %p59 = scmp.ne.s32.totalorder %s48, %s49
    %p60 = scmp.eq.s32.totalorder %s19, 0
    %p61 = por %p59, %p60
    %p62 = scmp.ne.s32.totalorder %s48, %s49
    %p63 = scmp.eq.s32.totalorder %s20, 1
    %p64 = por %p62, %p63
    %p66 = scmp.ne.s32.totalorder %s49, %s65
    %p67 = scmp.eq.s32.totalorder %s20, 0
    %p68 = por %p66, %p67
    %s70 = sadd.s32 %s69, 1
    %p73 = scmp.eq.s32.totalorder %s14, 1
    %p74 = scmp.ne.s32.totalorder %s69, %s71
    %p75 = scmp.eq.s32.totalorder %s14, 0
    %p76 = por %p74, %p75
    %p77 = scmp.ne.s32.totalorder %s69, %s71
    %p78 = scmp.eq.s32.totalorder %s19, 1
    %p79 = por %p77, %p78
    %p80 = scmp.ne.s32.totalorder %s71, %s72
    %p81 = scmp.eq.s32.totalorder %s19, 0
    %p82 = por %p80, %p81
    %p83 = scmp.ne.s32.totalorder %s71, %s72
    %p84 = scmp.eq.s32.totalorder %s20, 1
    %p85 = por %p83, %p84
    %p87 = scmp.ne.s32.totalorder %s72, %s86
    %p88 = scmp.eq.s32.totalorder %s20, 0
    %p89 = por %p87, %p88
    %s91 = sadd.s32 %s90, 1
    %p94 = scmp.eq.s32.totalorder %s14, 1
    %p95 = scmp.ne.s32.totalorder %s90, %s92
    %p96 = scmp.eq.s32.totalorder %s14, 0
    %p97 = por %p95, %p96
    %p98 = scmp.ne.s32.totalorder %s90, %s92
    %p99 = scmp.eq.s32.totalorder %s19, 1
    %p100 = por %p98, %p99
    %p101 = scmp.ne.s32.totalorder %s92, %s93
    %p102 = scmp.eq.s32.totalorder %s19, 0
    %p103 = por %p101, %p102
    %p104 = scmp.ne.s32.totalorder %s92, %s93
    %p105 = scmp.eq.s32.totalorder %s20, 1
    %p106 = por %p104, %p105
    %p108 = scmp.ne.s32.totalorder %s93, %s107
    %p109 = scmp.eq.s32.totalorder %s20, 0
    %p110 = por %p108, %p109
    %s112 = sadd.s32 %s111, 1
    %p115 = scmp.eq.s32.totalorder %s14, 1
    %p116 = scmp.ne.s32.totalorder %s111, %s113
    %p117 = scmp.eq.s32.totalorder %s14, 0
    %p118 = por %p116, %p117
    %p119 = scmp.ne.s32.totalorder %s111, %s113
    %p120 = scmp.eq.s32.totalorder %s19, 1
    %p121 = por %p119, %p120
    %p122 = scmp.ne.s32.totalorder %s113, %s114
    %p123 = scmp.eq.s32.totalorder %s19, 0
    %p124 = por %p122, %p123
    %p125 = scmp.ne.s32.totalorder %s113, %s114
    %p126 = scmp.eq.s32.totalorder %s20, 1
    %p127 = por %p125, %p126
    %p129 = scmp.ne.s32.totalorder %s114, %s128
    %p130 = scmp.eq.s32.totalorder %s20, 0
    %p131 = por %p129, %p130
    %s132 = ssub.s32 %s14, %s21
    %p133 = scmp.eq.s32.totalorder %s132, 0
    %s135 = sadd.s32 %s134, 1
    %s136 = scalar_select %p133, %s134, %s135
    %p139 = pneg %p133
    %p140 = scmp.eq.s32.totalorder %s14, 1
    %p141 = por %p139, %p140
    %p142 = scmp.ne.s32.totalorder %s134, %s137
    %p143 = scmp.eq.s32.totalorder %s14, 0
    %p144 = por %p142, %p143
    %p145 = scmp.ne.s32.totalorder %s134, %s137
    %p146 = scmp.eq.s32.totalorder %s19, 1
    %p147 = por %p145, %p146
    %p148 = scmp.ne.s32.totalorder %s137, %s138
    %p149 = scmp.eq.s32.totalorder %s19, 0
    %p150 = por %p148, %p149
    %p151 = scmp.ne.s32.totalorder %s137, %s138
    %p152 = scmp.eq.s32.totalorder %s20, 1
    %p153 = por %p151, %p152
    %p155 = scmp.ne.s32.totalorder %s138, %s154
    %p156 = scmp.eq.s32.totalorder %s20, 0
    %p157 = por %p155, %p156
    %s158 = ssub.s32 %s14, %s21
    %p159 = scmp.eq.s32.totalorder %s158, 0
    %s161 = sadd.s32 %s160, 1
    %s162 = scalar_select %p159, %s160, %s161
    %p165 = pneg %p159
    %p166 = scmp.eq.s32.totalorder %s14, 1
    %p167 = por %p165, %p166
    %p168 = scmp.ne.s32.totalorder %s160, %s163
    %p169 = scmp.eq.s32.totalorder %s14, 0
    %p170 = por %p168, %p169
    %p171 = scmp.ne.s32.totalorder %s160, %s163
    %p172 = scmp.eq.s32.totalorder %s19, 1
    %p173 = por %p171, %p172
    %p174 = scmp.ne.s32.totalorder %s163, %s164
    %p175 = scmp.eq.s32.totalorder %s19, 0
    %p176 = por %p174, %p175
    %p177 = scmp.ne.s32.totalorder %s163, %s164
    %p178 = scmp.eq.s32.totalorder %s20, 1
    %p179 = por %p177, %p178
    %p181 = scmp.ne.s32.totalorder %s164, %s180
    %p182 = scmp.eq.s32.totalorder %s20, 0
    %p183 = por %p181, %p182
    %p184 = scmp.le.s32.totalorder 1, %s14
    %p185 = scmp.lt.s32.totalorder %s14, 3
    %p186 = pnand %p184, %p185
    %p187 = pneg %p186
    // Predicated region
    $region9: #{qbottleneck_ins_forward.4} parent=5 // pred_check
      _
    $region10: #{qbottleneck_ins_forward.4} parent=5 // pred_check_branch
      %189 = sbr.rel (%p186) target = $region12
    $region11: #{qbottleneck_ins_forward.4} parent=5 // pred_region
      %s190 = ssub.s32 %s14, 1
      // Predicated region
      $region13: #{qbottleneck_ins_forward.4} parent=11 // pred_check
        %p191 = pneg %p35
      $region14: #{qbottleneck_ins_forward.4} parent=11 // pred_check_branch
        %193 = sbr.rel (%p191) target = $region16
      $region15: #{qbottleneck_ins_forward.4} parent=11 // pred_region
        _
      $region16: #{qbottleneck_ins_forward.4} parent=11 // pred_fallthru
        _
      // Predicated region
      $region17: #{qbottleneck_ins_forward.4} parent=11 // pred_check
        %p194 = pneg %p82
      $region18: #{qbottleneck_ins_forward.4} parent=11 // pred_check_branch
        %196 = sbr.rel (%p194) target = $region20
      $region19: #{qbottleneck_ins_forward.4} parent=11 // pred_region
        _
      $region20: #{qbottleneck_ins_forward.4} parent=11 // pred_fallthru
        _
      // Predicated region
      $region21: #{qbottleneck_ins_forward.4} parent=11 // pred_check
        %p197 = pneg %p103
      $region22: #{qbottleneck_ins_forward.4} parent=11 // pred_check_branch
        %199 = sbr.rel (%p197) target = $region24
      $region23: #{qbottleneck_ins_forward.4} parent=11 // pred_region
        _
      $region24: #{qbottleneck_ins_forward.4} parent=11 // pred_fallthru
        _
      // Predicated region
      $region25: #{qbottleneck_ins_forward.4} parent=11 // pred_check
        %p200 = pneg %p124
      $region26: #{qbottleneck_ins_forward.4} parent=11 // pred_check_branch
        %202 = sbr.rel (%p200) target = $region28
      $region27: #{qbottleneck_ins_forward.4} parent=11 // pred_region
        _
      $region28: #{qbottleneck_ins_forward.4} parent=11 // pred_fallthru
        _
    $region12: #{qbottleneck_ins_forward.4} parent=5 // pred_fallthru
      _
    %p203 = scmp.lt.s32.totalorder %s14, 2
    // Predicated region
    $region29: #{qbottleneck_ins_forward.4} parent=5 // pred_check
      %p204 = pneg %p203
    $region30: #{qbottleneck_ins_forward.4} parent=5 // pred_check_branch
      %206 = sbr.rel (%p204) target = $region32
    $region31: #{qbottleneck_ins_forward.4} parent=5 // pred_region
      // Predicated region
      $region33: #{qbottleneck_ins_forward.4} parent=31 // pred_check
        %p207 = pneg %p55
      $region34: #{qbottleneck_ins_forward.4} parent=31 // pred_check_branch
        %209 = sbr.rel (%p207) target = $region36
      $region35: #{qbottleneck_ins_forward.4} parent=31 // pred_region
        %p210 = scmp.lt.s32.totalorder %s14, 1
        %s211 = scalar_select %p210, %s14, 1
        %s212 = smul.addr %s211, 8
        %s213 = smul.addr %s212, 8
        %s214 = scalar_lea.vmem %s1, %s213
      $region36: #{qbottleneck_ins_forward.4} parent=31 // pred_fallthru
        _
    $region32: #{qbottleneck_ins_forward.4} parent=5 // pred_fallthru
      _
    %p215 = scmp.le.s32.totalorder 1, %s14
    %p216 = scmp.lt.s32.totalorder %s14, 3
    %p217 = pnand %p215, %p216
    %p218 = pneg %p217
    // Predicated region
    $region37: #{qbottleneck_ins_forward.4} parent=5 // pred_check
      _
    $region38: #{qbottleneck_ins_forward.4} parent=5 // pred_check_branch
      %220 = sbr.rel (%p217) target = $region40
    $region39: #{qbottleneck_ins_forward.4} parent=5 // pred_region
      %s221 = ssub.s32 %s14, 1
      %p222 = pneg %p35
      %p223 = pneg %p32
      %p224 = scmp.lt.s32.totalorder %s19, 1
      %s225 = scalar_select %p224, %s19, 1
      %s226 = smul.addr %s225, 8
      %s227 = smul.addr %s226, 8
      %s228 = scalar_lea.vmem %s1, %s227
      %p229 = pneg %p61
      %p230 = pneg %p58
      %p231 = pneg %p82
      %p232 = pneg %p79
      %p233 = pneg %p103
      %p234 = pneg %p100
      %p235 = pneg %p124
      %p236 = pneg %p121
      %p237 = pneg %p150
      %p238 = pneg %p147
      %p239 = scmp.lt.s32.totalorder %s19, 1
      %s240 = scalar_select %p239, %s19, 1
      %s241 = smul.addr %s240, 8
      %s242 = smul.addr %s241, 8
      %s243 = scalar_lea.vmem %s5, %s242
      %p244 = pneg %p176
      %p245 = pneg %p173
      %p246 = scmp.lt.s32.totalorder %s19, 1
      %s247 = scalar_select %p246, %s19, 1
      %s248 = scalar_lea.vmem %s6, %s247
      %p249 = scmp.lt.s32.totalorder %s19, 1
      %s250 = scalar_select %p249, %s19, 1
      %s251 = smul.addr %s250, 8
      %s252 = smul.addr %s251, 8
      %s253 = scalar_lea.vmem %s1, %s252
      %p254 = scmp.lt.s32.totalorder %s19, 1
      %s255 = scalar_select %p254, %s19, 1
      %s256 = smul.addr %s255, 8
      %s257 = smul.addr %s256, 8
      %s258 = scalar_lea.vmem %s5, %s257
      %p259 = scmp.lt.s32.totalorder %s19, 1
      %s260 = scalar_select %p259, %s19, 1
      %s261 = scalar_lea.vmem %s6, %s260
      %v262 = vld [vmem:[%s253] sm:$0xff]
      %v263 = vld [vmem:[%s253 + $0x8] sm:$0xff]
      %v264 = vld [vmem:[%s253 + $0x10] sm:$0xff]
      %v265 = vld [vmem:[%s253 + $0x18] sm:$0xff]
      %v266 = vld [vmem:[%s253 + $0x20] sm:$0xff]
      %v267 = vld [vmem:[%s253 + $0x28] sm:$0xff]
      %v268 = vld [vmem:[%s253 + $0x30] sm:$0xff]
      %v269 = vld [vmem:[%s253 + $0x38] sm:$0xff]
      %s270 = sld [smem:[#allocation2]]
      %v271 = vstv %s270
      %v272 = vrcp.pop %v271
      %s273 = vtos %v272
      %v274 = vstv %s273
      %v275 = vmul.f32 %v262, %v274
      %v276 = vmul.f32 %v263, %v274
      %v277 = vmul.f32 %v264, %v274
      %v278 = vmul.f32 %v265, %v274
      %v279 = vmul.f32 %v266, %v274
      %v280 = vmul.f32 %v267, %v274
      %v281 = vmul.f32 %v268, %v274
      %v282 = vmul.f32 %v269, %v274
      %v283 = vround.ne.pseudo %v275
      %v284 = vround.ne.pseudo %v276
      %v285 = vround.ne.pseudo %v277
      %v286 = vround.ne.pseudo %v278
      %v287 = vround.ne.pseudo %v279
      %v288 = vround.ne.pseudo %v280
      %v289 = vround.ne.pseudo %v281
      %v290 = vround.ne.pseudo %v282
      %v291 = vmax.f32 %v283, -128.0
      %v292 = vmax.f32 %v284, -128.0
      %v293 = vmax.f32 %v285, -128.0
      %v294 = vmax.f32 %v286, -128.0
      %v295 = vmax.f32 %v287, -128.0
      %v296 = vmax.f32 %v288, -128.0
      %v297 = vmax.f32 %v289, -128.0
      %v298 = vmax.f32 %v290, -128.0
      %v299 = vmin.f32 %v291, 127.0
      %v300 = vmin.f32 %v292, 127.0
      %v301 = vmin.f32 %v293, 127.0
      %v302 = vmin.f32 %v294, 127.0
      %v303 = vmin.f32 %v295, 127.0
      %v304 = vmin.f32 %v296, 127.0
      %v305 = vmin.f32 %v297, 127.0
      %v306 = vmin.f32 %v298, 127.0
      %v307 = vstv %s270
      %v308 = vmul.f32 %v299, %v307
      %v309 = vmul.f32 %v300, %v307
      %v310 = vmul.f32 %v301, %v307
      %v311 = vmul.f32 %v302, %v307
      %v312 = vmul.f32 %v303, %v307
      %v313 = vmul.f32 %v304, %v307
      %v314 = vmul.f32 %v305, %v307
      %v315 = vmul.f32 %v306, %v307
      %v316 = vld [vmem:[%s2] sm:$0xff]
      %v317 = vld [vmem:[%s2 + $0x8] sm:$0xff]
      %v318 = vld [vmem:[%s2 + $0x10] sm:$0xff]
      %v319 = vld [vmem:[%s2 + $0x18] sm:$0xff]
      %v320 = vld [vmem:[%s2 + $0x20] sm:$0xf]
      %vm321 = vcmask 293888
      %v323 = vsel %vm321, %v308, 0
      %v326 = vsel %vm321, %v309, 0
      %v329 = vsel %vm321, %v310, 0
      %v332 = vsel %vm321, %v311, 0
      %v335 = vsel %vm321, %v312, 0
      %v338 = vsel %vm321, %v313, 0
      %v341 = vsel %vm321, %v314, 0
      %v344 = vsel %vm321, %v315, 0
      %vm346 = vcmask 1043456
      %v348 = vsel %vm346, %v320, 0
      %350 = vmatprep.subr.mxu0 0.0
      %351 = vmatpush1.msra.mxu0 0.0
      %352 = vmatprep.subr.mxu0 0.0
      %353 = vmatpush1.msra.mxu0 0.0
      %354 = vmatprep.subr.mxu0 0.0
      %355 = vmatpush1.msra.mxu0 0.0
      %356 = vmatprep.subr.mxu0 0.0
      %357 = vmatpush1.msra.mxu0 0.0
      %358 = vmatprep.subr.mxu0 0.0
      %359 = vmatpush1.msra.mxu0 0.0
      %360 = vmatprep.subr.mxu0 0.0
      %361 = vmatpush1.msra.mxu0 0.0
      %362 = vmatprep.subr.mxu0 0.0
      %363 = vmatpush1.msra.mxu0 0.0
      %364 = vmatprep.subr.mxu0 0.0
      %365 = vmatpush1.msra.mxu0 0.0
      %366 = vmatprep.subr.mxu0 0.0
      %367 = vmatpush1.msra.mxu0 0.0
      %368 = vmatprep.subr.mxu0 0.0
      %369 = vmatpush1.msra.mxu0 0.0
      %370 = vmatprep.subr.mxu0 0.0
      %371 = vmatpush1.msra.mxu0 0.0
      %372 = vmatprep.subr.mxu0 0.0
      %373 = vmatpush1.msra.mxu0 %v348
      %374 = vmatprep.subr.mxu0 0.0
      %375 = vmatpush1.msra.mxu0 %v319
      %376 = vmatprep.subr.mxu0 0.0
      %377 = vmatpush1.msra.mxu0 %v318
      %378 = vmatprep.subr.mxu0 0.0
      %379 = vmatpush1.msra.mxu0 %v317
      %380 = vmatprep.subr.mxu0 0.0
      %381 = vmatpush1.msra.mxu0 %v316
      %382 = vmatprep.subr.mxu0 0.0
      %383 = vmatpush2.msra.mxu0 0.0
      %384 = vmatprep.subr.mxu0 0.0
      %385 = vmatpush2.msra.mxu0 0.0
      %386 = vmatprep.subr.mxu0 0.0
      %387 = vmatpush2.msra.mxu0 0.0
      %388 = vmatprep.subr.mxu0 0.0
      %389 = vmatpush2.msra.mxu0 0.0
      %390 = vmatprep.subr.mxu0 0.0
      %391 = vmatpush2.msra.mxu0 0.0
      %392 = vmatprep.subr.mxu0 0.0
      %393 = vmatpush2.msra.mxu0 0.0
      %394 = vmatprep.subr.mxu0 0.0
      %395 = vmatpush2.msra.mxu0 0.0
      %396 = vmatprep.subr.mxu0 0.0
      %397 = vmatpush2.msra.mxu0 0.0
      %398 = vmatprep.subr.mxu0 0.0
      %399 = vmatpush2.msra.mxu0 0.0
      %400 = vmatprep.subr.mxu0 0.0
      %401 = vmatpush2.msra.mxu0 0.0
      %402 = vmatprep.subr.mxu0 0.0
      %403 = vmatpush2.msra.mxu0 0.0
      %404 = vmatprep.subr.mxu0 0.0
      %405 = vmatpush2.msra.mxu0 0.0
      %406 = vmatprep.subr.mxu0 0.0
      %407 = vmatpush2.msra.mxu0 0.0
      %408 = vmatprep.subr.mxu0 0.0
      %409 = vmatpush2.msra.mxu0 0.0
      %410 = vmatprep.subr.mxu0 0.0
      %411 = vmatpush2.msra.mxu0 0.0
      %412 = vmatprep.subr.mxu0 0.0
      %413 = vmatpush2.msra.mxu0 0.0
      %414 = vmatprep.mubr.f32.mxu0 0.0
      %415 = vmatmul.mubr.f32.gmra.mxu0 %v323
      %v416 = vpop.f32.mrf.mxu0
      %v417 = vadd.f32 0.0, %v416
      %v418 = vpop.f32.mrf.mxu0
      %419 = vmatprep.mubr.f32.mxu0 0.0
      %420 = vmatmul.mubr.f32.gmra.mxu0 %v326
      %v421 = vpop.f32.mrf.mxu0
      %v422 = vadd.f32 0.0, %v421
      %v423 = vpop.f32.mrf.mxu0
      %424 = vmatprep.mubr.f32.mxu0 0.0
      %425 = vmatmul.mubr.f32.gmra.mxu0 %v329
      %v426 = vpop.f32.mrf.mxu0
      %v427 = vadd.f32 0.0, %v426
      %v428 = vpop.f32.mrf.mxu0
      %429 = vmatprep.mubr.f32.mxu0 0.0
      %430 = vmatmul.mubr.f32.gmra.mxu0 %v332
      %v431 = vpop.f32.mrf.mxu0
      %v432 = vadd.f32 0.0, %v431
      %v433 = vpop.f32.mrf.mxu0
      %434 = vmatprep.mubr.f32.mxu0 0.0
      %435 = vmatmul.mubr.f32.gmra.mxu0 %v335
      %v436 = vpop.f32.mrf.mxu0
      %v437 = vadd.f32 0.0, %v436
      %v438 = vpop.f32.mrf.mxu0
      %439 = vmatprep.mubr.f32.mxu0 0.0
      %440 = vmatmul.mubr.f32.gmra.mxu0 %v338
      %v441 = vpop.f32.mrf.mxu0
      %v442 = vadd.f32 0.0, %v441
      %v443 = vpop.f32.mrf.mxu0
      %444 = vmatprep.mubr.f32.mxu0 0.0
      %445 = vmatmul.mubr.f32.gmra.mxu0 %v341
      %v446 = vpop.f32.mrf.mxu0
      %v447 = vadd.f32 0.0, %v446
      %v448 = vpop.f32.mrf.mxu0
      %449 = vmatprep.mubr.f32.mxu0 0.0
      %450 = vmatmul.mubr.f32.gmra.mxu0 %v344
      %v451 = vpop.f32.mrf.mxu0
      %v452 = vadd.f32 0.0, %v451
      %v453 = vpop.f32.mrf.mxu0
      %454 = vdwg.mxu0
      %v455 = vld [vmem:[%s3] sm:$0x1]
      %v456 = vld [vmem:[%s4] sm:$0x1]
      %v457 = vadd.f32 %v417, %v422
      %v458 = vadd.f32 %v457, %v427
      %v459 = vadd.f32 %v458, %v432
      %v460 = vadd.f32 %v459, %v437
      %v461 = vadd.f32 %v460, %v442
      %v462 = vadd.f32 %v461, %v447
      %v463 = vadd.f32 %v462, %v452
      %v464 = vrot.slane %v463, 4
      %v465 = vadd.f32 %v463, %v464
      %v466 = vrot.slane %v465, 2
      %v467 = vadd.f32 %v465, %v466
      %v468 = vrot.slane %v467, 1
      %v469 = vadd.f32 %v467, %v468
      %v470 = vrcp.pop 64.0
      %v471 = vmul.f32 %v469, %v470
      %v472 = vsub.f32 %v417, %v471
      %v473 = vsub.f32 %v422, %v471
      %v474 = vsub.f32 %v427, %v471
      %v475 = vsub.f32 %v432, %v471
      %v476 = vsub.f32 %v437, %v471
      %v477 = vsub.f32 %v442, %v471
      %v478 = vsub.f32 %v447, %v471
      %v479 = vsub.f32 %v452, %v471
      %v480 = vmul.f32 %v472, %v472
      %v481 = vmul.f32 %v473, %v473
      %v482 = vmul.f32 %v474, %v474
      %v483 = vmul.f32 %v475, %v475
      %v484 = vmul.f32 %v476, %v476
      %v485 = vmul.f32 %v477, %v477
      %v486 = vmul.f32 %v478, %v478
      %v487 = vmul.f32 %v479, %v479
      %v488 = vadd.f32 %v480, %v481
      %v489 = vadd.f32 %v488, %v482
      %v490 = vadd.f32 %v489, %v483
      %v491 = vadd.f32 %v490, %v484
      %v492 = vadd.f32 %v491, %v485
      %v493 = vadd.f32 %v492, %v486
      %v494 = vadd.f32 %v493, %v487
      %v495 = vrot.slane %v494, 4
      %v496 = vadd.f32 %v494, %v495
      %v497 = vrot.slane %v496, 2
      %v498 = vadd.f32 %v496, %v497
      %v499 = vrot.slane %v498, 1
      %v500 = vadd.f32 %v498, %v499
      %v501 = vmul.f32 %v500, %v470
      %v502 = vadd.f32 %v501, 1e-05
      %v503 = vrsqrt.pop %v502
      %v504 = vmul.f32 %v472, %v503
      %v505 = vmul.f32 %v473, %v503
      %v506 = vmul.f32 %v474, %v503
      %v507 = vmul.f32 %v475, %v503
      %v508 = vmul.f32 %v476, %v503
      %v509 = vmul.f32 %v477, %v503
      %v510 = vmul.f32 %v478, %v503
      %v511 = vmul.f32 %v479, %v503
      %v513 = vlaneseq
      %v514 = vshrl.u32 %v513, 7
      %v515 = vsub.s32 0, %v514
      %v516 = vrot.slane %v455, %v515
      %v518 = vmul.f32 %v504, %v516
      %v519 = vmul.f32 %v505, %v516
      %v520 = vmul.f32 %v506, %v516
      %v521 = vmul.f32 %v507, %v516
      %v522 = vmul.f32 %v508, %v516
      %v523 = vmul.f32 %v509, %v516
      %v524 = vmul.f32 %v510, %v516
      %v525 = vmul.f32 %v511, %v516
      %v527 = vlaneseq
      %v528 = vshrl.u32 %v527, 7
      %v529 = vsub.s32 0, %v528
      %v530 = vrot.slane %v456, %v529
      %v532 = vadd.f32 %v518, %v530
      %v533 = vadd.f32 %v519, %v530
      %v534 = vadd.f32 %v520, %v530
      %v535 = vadd.f32 %v521, %v530
      %v536 = vadd.f32 %v522, %v530
      %v537 = vadd.f32 %v523, %v530
      %v538 = vadd.f32 %v524, %v530
      %v539 = vadd.f32 %v525, %v530
      %540 = vst [vmem:[%s258] sm:$0xff] %v532
      %541 = vst [vmem:[%s258 + $0x8] sm:$0xff] %v533
      %542 = vst [vmem:[%s258 + $0x10] sm:$0xff] %v534
      %543 = vst [vmem:[%s258 + $0x18] sm:$0xff] %v535
      %544 = vst [vmem:[%s258 + $0x20] sm:$0xff] %v536
      %545 = vst [vmem:[%s258 + $0x28] sm:$0xff] %v537
      %546 = vst [vmem:[%s258 + $0x30] sm:$0xff] %v538
      %547 = vst [vmem:[%s258 + $0x38] sm:$0xff] %v539
      %v548 = vand.u32 2147483647, %v532
      %v549 = vand.u32 2147483647, %v533
      %v550 = vand.u32 2147483647, %v534
      %v551 = vand.u32 2147483647, %v535
      %v552 = vand.u32 2147483647, %v536
      %v553 = vand.u32 2147483647, %v537
      %v554 = vand.u32 2147483647, %v538
      %v555 = vand.u32 2147483647, %v539
      %v556 = vmax.f32 %v548, %v552
      %v557 = vmax.f32 %v549, %v553
      %v558 = vmax.f32 %v550, %v554
      %v559 = vmax.f32 %v551, %v555
      %v560 = vmax.f32 %v556, %v557
      %v561 = vmax.f32 %v558, %v559
      %v562 = vmax.f32 %v560, %v561
      %v563 = vrot.slane %v562, 4
      %v564 = vmax.f32 %v562, %v563
      %v565 = vrot.slane %v564, 2
      %v566 = vmax.f32 %v564, %v565
      %v567 = vrot.slane %v566, 1
      %v568 = vmax.f32 %v566, %v567
      %569 = vst [vmem:[%s261] sm:$0x1] %v568
      %p570 = scmp.lt.s32.totalorder %s19, 1
      %s571 = scalar_select %p570, %s19, 1
      %s572 = smul.addr %s571, 8
      %s573 = smul.addr %s572, 8
      %s574 = scalar_lea.vmem %s5, %s573
      %p575 = scmp.lt.s32.totalorder %s19, 1
      %s576 = scalar_select %p575, %s19, 1
      %s577 = scalar_lea.vmem %s6, %s576
      // Predicated region
      $region41: #{qbottleneck_ins_forward.4} parent=39 // pred_check
        %p578 = pneg %p147
      $region42: #{qbottleneck_ins_forward.4} parent=39 // pred_check_branch
        %580 = sbr.rel (%p578) target = $region44
      $region43: #{qbottleneck_ins_forward.4} parent=39 // pred_region
        _
      $region44: #{qbottleneck_ins_forward.4} parent=39 // pred_fallthru
        _
      // Predicated region
      $region45: #{qbottleneck_ins_forward.4} parent=39 // pred_check
        %p581 = pneg %p173
      $region46: #{qbottleneck_ins_forward.4} parent=39 // pred_check_branch
        %583 = sbr.rel (%p581) target = $region48
      $region47: #{qbottleneck_ins_forward.4} parent=39 // pred_region
        _
      $region48: #{qbottleneck_ins_forward.4} parent=39 // pred_fallthru
        _
    $region40: #{qbottleneck_ins_forward.4} parent=5 // pred_fallthru
      _
    %p584 = scmp.le.s32.totalorder 2, %s14
    // Predicated region
    $region49: #{qbottleneck_ins_forward.4} parent=5 // pred_check
      %p585 = pneg %p584
    $region50: #{qbottleneck_ins_forward.4} parent=5 // pred_check_branch
      %587 = sbr.rel (%p585) target = $region52
    $region51: #{qbottleneck_ins_forward.4} parent=5 // pred_region
      %s588 = ssub.s32 %s14, 2
      // Predicated region
      $region53: #{qbottleneck_ins_forward.4} parent=51 // pred_check
        %p589 = pneg %p153
      $region54: #{qbottleneck_ins_forward.4} parent=51 // pred_check_branch
        %591 = sbr.rel (%p589) target = $region56
      $region55: #{qbottleneck_ins_forward.4} parent=51 // pred_region
        %p592 = scmp.lt.s32.totalorder %s20, 1
        %s593 = scalar_select %p592, %s20, 1
        %s594 = smul.addr %s593, 8
        %s595 = smul.addr %s594, 8
        %s596 = scalar_lea.vmem %s5, %s595
      $region56: #{qbottleneck_ins_forward.4} parent=51 // pred_fallthru
        _
      // Predicated region
      $region57: #{qbottleneck_ins_forward.4} parent=51 // pred_check
        %p597 = pneg %p179
      $region58: #{qbottleneck_ins_forward.4} parent=51 // pred_check_branch
        %599 = sbr.rel (%p597) target = $region60
      $region59: #{qbottleneck_ins_forward.4} parent=51 // pred_region
        %p600 = scmp.lt.s32.totalorder %s20, 1
        %s601 = scalar_select %p600, %s20, 1
        %s602 = scalar_lea.vmem %s6, %s601
      $region60: #{qbottleneck_ins_forward.4} parent=51 // pred_fallthru
        _
    $region52: #{qbottleneck_ins_forward.4} parent=5 // pred_fallthru
      _
  $region6: #{qbottleneck_ins_forward.4} parent=0 // loop_footer
    %s18 = sadd.s32 1, %s14
  $region7: #{qbottleneck_ins_forward.4} parent=0 // loop_footer_branch
    %13 = sbr.rel target = $region3
  $region8: #{qbottleneck_ins_forward.4} parent=0 // loop_exit
    _

// kernel: qbottleneck_ins_forward.3
$region0: #{qbottleneck_ins_forward.3}
  #allocation0 [shape = 'u32[]', space=smem, size = 0x4, offset = 0x4, fixed_abs, tag = 'smem constant byte address 0x4 - core index']
  #allocation1 [shape = 'u32[144,128]{1,0:T(1,128)}', space=vmem, size = 0x12000, scoped, tag = 'internal scratch']
  %s0 = inlined_call_operand.vmem [shape: f32[2,256,8], index: 0, kind: input, shape index: {}]
  %s1 = inlined_call_operand.vmem [shape: f32[8,128], index: 1, kind: input, shape index: {}]
  %s2 = inlined_call_operand.vmem [shape: f32[1,128], index: 2, kind: input, shape index: {}]
  %s3 = inlined_call_operand.vmem [shape: f32[1,128], index: 3, kind: input, shape index: {}]
  %s4 = inlined_call_operand.vmem [shape: f32[2,256,128], index: 4, kind: output, shape index: {0}]
  %s5 = inlined_call_operand.vmem [shape: f32[2,1,128], index: 5, kind: output, shape index: {1}]
  %6 = xla_tuple %s4, %s5
  %s7 = sld [smem:[#allocation0]]
  $region57: #{qbottleneck_ins_forward.3} parent=0
    _
  %s9 = ssub.s32 1, %s7
  %s10 = scalar_select 0, %s9, %s7
  loop: start=0, step=1, limit=4
  $region2: #{qbottleneck_ins_forward.3} parent=0 // loop_pre_header
    _
  $region3: #{qbottleneck_ins_forward.3} parent=0 // loop_header
    %s12 = sphi 0, %s16
    %p13 = scmp.ge.s32.totalorder %s12, 4
    %s22 = sphi 0, %s24
    %s25 = sphi 0, %s22
    %s26 = sphi 0, %s25
    %s42 = sphi 0, %s26
    %s46 = sphi 0, %s46
    %s48 = sphi 0, %s46
    %s49 = sphi 0, %s48
    %s63 = sphi 0, %s49
    %s67 = sphi 0, %s67
    %s69 = sphi 0, %s67
    %s70 = sphi 0, %s69
    %s84 = sphi 0, %s70
    %s88 = sphi 0, %s88
    %s90 = sphi 0, %s88
    %s91 = sphi 0, %s90
    %s105 = sphi 0, %s91
    %s111 = sphi 0, %s113
    %s114 = sphi 0, %s111
    %s115 = sphi 0, %s114
    %s131 = sphi 0, %s115
    %s137 = sphi 0, %s139
    %s140 = sphi 0, %s137
    %s141 = sphi 0, %s140
    %s157 = sphi 0, %s141
  $region4: #{qbottleneck_ins_forward.3} parent=0 // loop_header_branch
    %15 = sbr.rel (%p13) target = $region8
  $region5: #{qbottleneck_ins_forward.3} parent=0 // loop_body
    %s17 = ssub.s32 %s12, 1
    %s18 = ssub.s32 %s12, 2
    %s19 = sadd.s32 %s12, 1
    %s20 = ssub.s32 %s12, %s19
    %p21 = scmp.eq.s32.totalorder %s20, 0
    %s23 = sadd.s32 %s22, 1
    %s24 = scalar_select %p21, %s22, %s23
    %p27 = pneg %p21
    %p28 = scmp.eq.s32.totalorder %s12, 1
    %p29 = por %p27, %p28
    %p30 = scmp.ne.s32.totalorder %s22, %s25
    %p31 = scmp.eq.s32.totalorder %s12, 0
    %p32 = por %p30, %p31
    %p33 = scmp.ne.s32.totalorder %s22, %s25
    %p34 = scmp.eq.s32.totalorder %s17, 1
    %p35 = por %p33, %p34
    %p36 = scmp.ne.s32.totalorder %s25, %s26
    %p37 = scmp.eq.s32.totalorder %s17, 0
    %p38 = por %p36, %p37
    %p39 = scmp.ne.s32.totalorder %s25, %s26
    %p40 = scmp.eq.s32.totalorder %s18, 1
    %p41 = por %p39, %p40
    %p43 = scmp.ne.s32.totalorder %s26, %s42
    %p44 = scmp.eq.s32.totalorder %s18, 0
    %p45 = por %p43, %p44
    %s47 = sadd.s32 %s46, 1
    %p50 = scmp.eq.s32.totalorder %s12, 1
    %p51 = scmp.ne.s32.totalorder %s46, %s48
    %p52 = scmp.eq.s32.totalorder %s12, 0
    %p53 = por %p51, %p52
    %p54 = scmp.ne.s32.totalorder %s46, %s48
    %p55 = scmp.eq.s32.totalorder %s17, 1
    %p56 = por %p54, %p55
    %p57 = scmp.ne.s32.totalorder %s48, %s49
    %p58 = scmp.eq.s32.totalorder %s17, 0
    %p59 = por %p57, %p58
    %p60 = scmp.ne.s32.totalorder %s48, %s49
    %p61 = scmp.eq.s32.totalorder %s18, 1
    %p62 = por %p60, %p61
    %p64 = scmp.ne.s32.totalorder %s49, %s63
    %p65 = scmp.eq.s32.totalorder %s18, 0
    %p66 = por %p64, %p65
    %s68 = sadd.s32 %s67, 1
    %p71 = scmp.eq.s32.totalorder %s12, 1
    %p72 = scmp.ne.s32.totalorder %s67, %s69
    %p73 = scmp.eq.s32.totalorder %s12, 0
    %p74 = por %p72, %p73
    %p75 = scmp.ne.s32.totalorder %s67, %s69
    %p76 = scmp.eq.s32.totalorder %s17, 1
    %p77 = por %p75, %p76
    %p78 = scmp.ne.s32.totalorder %s69, %s70
    %p79 = scmp.eq.s32.totalorder %s17, 0
    %p80 = por %p78, %p79
    %p81 = scmp.ne.s32.totalorder %s69, %s70
    %p82 = scmp.eq.s32.totalorder %s18, 1
    %p83 = por %p81, %p82
    %p85 = scmp.ne.s32.totalorder %s70, %s84
    %p86 = scmp.eq.s32.totalorder %s18, 0
    %p87 = por %p85, %p86
    %s89 = sadd.s32 %s88, 1
    %p92 = scmp.eq.s32.totalorder %s12, 1
    %p93 = scmp.ne.s32.totalorder %s88, %s90
    %p94 = scmp.eq.s32.totalorder %s12, 0
    %p95 = por %p93, %p94
    %p96 = scmp.ne.s32.totalorder %s88, %s90
    %p97 = scmp.eq.s32.totalorder %s17, 1
    %p98 = por %p96, %p97
    %p99 = scmp.ne.s32.totalorder %s90, %s91
    %p100 = scmp.eq.s32.totalorder %s17, 0
    %p101 = por %p99, %p100
    %p102 = scmp.ne.s32.totalorder %s90, %s91
    %p103 = scmp.eq.s32.totalorder %s18, 1
    %p104 = por %p102, %p103
    %p106 = scmp.ne.s32.totalorder %s91, %s105
    %p107 = scmp.eq.s32.totalorder %s18, 0
    %p108 = por %p106, %p107
    %s109 = ssub.s32 %s12, %s19
    %p110 = scmp.eq.s32.totalorder %s109, 0
    %s112 = sadd.s32 %s111, 1
    %s113 = scalar_select %p110, %s111, %s112
    %p116 = pneg %p110
    %p117 = scmp.eq.s32.totalorder %s12, 1
    %p118 = por %p116, %p117
    %p119 = scmp.ne.s32.totalorder %s111, %s114
    %p120 = scmp.eq.s32.totalorder %s12, 0
    %p121 = por %p119, %p120
    %p122 = scmp.ne.s32.totalorder %s111, %s114
    %p123 = scmp.eq.s32.totalorder %s17, 1
    %p124 = por %p122, %p123
    %p125 = scmp.ne.s32.totalorder %s114, %s115
    %p126 = scmp.eq.s32.totalorder %s17, 0
    %p127 = por %p125, %p126
    %p128 = scmp.ne.s32.totalorder %s114, %s115
    %p129 = scmp.eq.s32.totalorder %s18, 1
    %p130 = por %p128, %p129
    %p132 = scmp.ne.s32.totalorder %s115, %s131
    %p133 = scmp.eq.s32.totalorder %s18, 0
    %p134 = por %p132, %p133
    %s135 = ssub.s32 %s12, %s19
    %p136 = scmp.eq.s32.totalorder %s135, 0
    %s138 = sadd.s32 %s137, 1
    %s139 = scalar_select %p136, %s137, %s138
    %p142 = pneg %p136
    %p143 = scmp.eq.s32.totalorder %s12, 1
    %p144 = por %p142, %p143
    %p145 = scmp.ne.s32.totalorder %s137, %s140
    %p146 = scmp.eq.s32.totalorder %s12, 0
    %p147 = por %p145, %p146
    %p148 = scmp.ne.s32.totalorder %s137, %s140
    %p149 = scmp.eq.s32.totalorder %s17, 1
    %p150 = por %p148, %p149
    %p151 = scmp.ne.s32.totalorder %s140, %s141
    %p152 = scmp.eq.s32.totalorder %s17, 0
    %p153 = por %p151, %p152
    %p154 = scmp.ne.s32.totalorder %s140, %s141
    %p155 = scmp.eq.s32.totalorder %s18, 1
    %p156 = por %p154, %p155
    %p158 = scmp.ne.s32.totalorder %s141, %s157
    %p159 = scmp.eq.s32.totalorder %s18, 0
    %p160 = por %p158, %p159
    %p161 = scmp.le.s32.totalorder 1, %s12
    %p162 = scmp.lt.s32.totalorder %s12, 3
    %p163 = pnand %p161, %p162
    %p164 = pneg %p163
    // Predicated region
    $region9: #{qbottleneck_ins_forward.3} parent=5 // pred_check
      _
    $region10: #{qbottleneck_ins_forward.3} parent=5 // pred_check_branch
      %166 = sbr.rel (%p163) target = $region12
    $region11: #{qbottleneck_ins_forward.3} parent=5 // pred_region
      %s167 = ssub.s32 %s12, 1
      // Predicated region
      $region13: #{qbottleneck_ins_forward.3} parent=11 // pred_check
        %p168 = pneg %p59
      $region14: #{qbottleneck_ins_forward.3} parent=11 // pred_check_branch
        %170 = sbr.rel (%p168) target = $region16
      $region15: #{qbottleneck_ins_forward.3} parent=11 // pred_region
        _
      $region16: #{qbottleneck_ins_forward.3} parent=11 // pred_fallthru
        _
      // Predicated region
      $region17: #{qbottleneck_ins_forward.3} parent=11 // pred_check
        %p171 = pneg %p80
      $region18: #{qbottleneck_ins_forward.3} parent=11 // pred_check_branch
        %173 = sbr.rel (%p171) target = $region20
      $region19: #{qbottleneck_ins_forward.3} parent=11 // pred_region
        _
      $region20: #{qbottleneck_ins_forward.3} parent=11 // pred_fallthru
        _
      // Predicated region
      $region21: #{qbottleneck_ins_forward.3} parent=11 // pred_check
        %p174 = pneg %p101
      $region22: #{qbottleneck_ins_forward.3} parent=11 // pred_check_branch
        %176 = sbr.rel (%p174) target = $region24
      $region23: #{qbottleneck_ins_forward.3} parent=11 // pred_region
        _
      $region24: #{qbottleneck_ins_forward.3} parent=11 // pred_fallthru
        _
    $region12: #{qbottleneck_ins_forward.3} parent=5 // pred_fallthru
      _
    %p177 = scmp.lt.s32.totalorder %s12, 2
    // Predicated region
    $region25: #{qbottleneck_ins_forward.3} parent=5 // pred_check
      %p178 = pneg %p177
    $region26: #{qbottleneck_ins_forward.3} parent=5 // pred_check_branch
      %180 = sbr.rel (%p178) target = $region28
    $region27: #{qbottleneck_ins_forward.3} parent=5 // pred_region
      // Predicated region
      $region29: #{qbottleneck_ins_forward.3} parent=27 // pred_check
        %p181 = pneg %p32
      $region30: #{qbottleneck_ins_forward.3} parent=27 // pred_check_branch
        %183 = sbr.rel (%p181) target = $region32
      $region31: #{qbottleneck_ins_forward.3} parent=27 // pred_region
        %p184 = scmp.lt.s32.totalorder %s12, 1
        %s185 = scalar_select %p184, %s12, 1
        %s186 = smul.addr %s185, 32
        %s187 = smul.addr %s186, 8
        %s188 = scalar_lea.vmem %s0, %s187
      $region32: #{qbottleneck_ins_forward.3} parent=27 // pred_fallthru
        _
    $region28: #{qbottleneck_ins_forward.3} parent=5 // pred_fallthru
      _
    %p189 = scmp.le.s32.totalorder 1, %s12
    %p190 = scmp.lt.s32.totalorder %s12, 3
    %p191 = pnand %p189, %p190
    %p192 = pneg %p191
    // Predicated region
    $region33: #{qbottleneck_ins_forward.3} parent=5 // pred_check
      _
    $region34: #{qbottleneck_ins_forward.3} parent=5 // pred_check_branch
      %194 = sbr.rel (%p191) target = $region36
    $region35: #{qbottleneck_ins_forward.3} parent=5 // pred_region
      %s195 = ssub.s32 %s12, 1
      %p196 = scmp.lt.s32.totalorder %s17, 1
      %s197 = scalar_select %p196, %s17, 1
      %s198 = smul.addr %s197, 32
      %s199 = smul.addr %s198, 8
      %s200 = scalar_lea.vmem %s0, %s199
      %p201 = pneg %p38
      %p202 = pneg %p35
      %p203 = pneg %p59
      %p204 = pneg %p56
      %p205 = pneg %p80
      %p206 = pneg %p77
      %p207 = pneg %p101
      %p208 = pneg %p98
      %p209 = pneg %p127
      %p210 = pneg %p124
      %p211 = scmp.lt.s32.totalorder %s17, 1
      %s212 = scalar_select %p211, %s17, 1
      %s213 = smul.addr %s212, 32
      %s214 = smul.addr %s213, 8
      %s215 = scalar_lea.vmem %s4, %s214
      %p216 = pneg %p153
      %p217 = pneg %p150
      %p218 = scmp.lt.s32.totalorder %s17, 1
      %s219 = scalar_select %p218, %s17, 1
      %s220 = scalar_lea.vmem %s5, %s219
      %p221 = scmp.lt.s32.totalorder %s17, 1
      %s222 = scalar_select %p221, %s17, 1
      %s223 = smul.addr %s222, 32
      %s224 = smul.addr %s223, 8
      %s225 = scalar_lea.vmem %s0, %s224
      %p226 = scmp.lt.s32.totalorder %s17, 1
      %s227 = scalar_select %p226, %s17, 1
      %s228 = smul.addr %s227, 32
      %s229 = smul.addr %s228, 8
      %s230 = scalar_lea.vmem %s4, %s229
      %p231 = scmp.lt.s32.totalorder %s17, 1
      %s232 = scalar_select %p231, %s17, 1
      %s233 = scalar_lea.vmem %s5, %s232
      %v234 = vld [vmem:[%s225] sm:$0xff]
      %v235 = vld [vmem:[%s225 + $0x8] sm:$0xff]
      %v236 = vld [vmem:[%s225 + $0x10] sm:$0xff]
      %v237 = vld [vmem:[%s225 + $0x18] sm:$0xff]
      %v238 = vld [vmem:[%s225 + $0x20] sm:$0xff]
      %v239 = vld [vmem:[%s225 + $0x28] sm:$0xff]
      %v240 = vld [vmem:[%s225 + $0x30] sm:$0xff]
      %v241 = vld [vmem:[%s225 + $0x38] sm:$0xff]
      %v242 = vld [vmem:[%s225 + $0x40] sm:$0xff]
      %v243 = vld [vmem:[%s225 + $0x48] sm:$0xff]
      %v244 = vld [vmem:[%s225 + $0x50] sm:$0xff]
      %v245 = vld [vmem:[%s225 + $0x58] sm:$0xff]
      %v246 = vld [vmem:[%s225 + $0x60] sm:$0xff]
      %v247 = vld [vmem:[%s225 + $0x68] sm:$0xff]
      %v248 = vld [vmem:[%s225 + $0x70] sm:$0xff]
      %v249 = vld [vmem:[%s225 + $0x78] sm:$0xff]
      %v250 = vld [vmem:[%s225 + $0x80] sm:$0xff]
      %v251 = vld [vmem:[%s225 + $0x88] sm:$0xff]
      %v252 = vld [vmem:[%s225 + $0x90] sm:$0xff]
      %v253 = vld [vmem:[%s225 + $0x98] sm:$0xff]
      %v254 = vld [vmem:[%s225 + $0xa0] sm:$0xff]
      %v255 = vld [vmem:[%s225 + $0xa8] sm:$0xff]
      %v256 = vld [vmem:[%s225 + $0xb0] sm:$0xff]
      %v257 = vld [vmem:[%s225 + $0xb8] sm:$0xff]
      %v258 = vld [vmem:[%s225 + $0xc0] sm:$0xff]
      %v259 = vld [vmem:[%s225 + $0xc8] sm:$0xff]
      %v260 = vld [vmem:[%s225 + $0xd0] sm:$0xff]
      %v261 = vld [vmem:[%s225 + $0xd8] sm:$0xff]
      %v262 = vld [vmem:[%s225 + $0xe0] sm:$0xff]
      %v263 = vld [vmem:[%s225 + $0xe8] sm:$0xff]
      %v264 = vld [vmem:[%s225 + $0xf0] sm:$0xff]
      %v265 = vld [vmem:[%s225 + $0xf8] sm:$0xff]
      %v266 = vld [vmem:[%s1] sm:$0xff]
      %vm267 = vcmask 64512
      %v269 = vsel %vm267, %v234, 0
      %v272 = vsel %vm267, %v235, 0
      %v275 = vsel %vm267, %v236, 0
      %v278 = vsel %vm267, %v237, 0
      %v281 = vsel %vm267, %v238, 0
      %v284 = vsel %vm267, %v239, 0
      %v287 = vsel %vm267, %v240, 0
      %v290 = vsel %vm267, %v241, 0
      %v293 = vsel %vm267, %v242, 0
      %v296 = vsel %vm267, %v243, 0
      %v299 = vsel %vm267, %v244, 0
      %v302 = vsel %vm267, %v245, 0
      %v305 = vsel %vm267, %v246, 0
      %v308 = vsel %vm267, %v247, 0
      %v311 = vsel %vm267, %v248, 0
      %v314 = vsel %vm267, %v249, 0
      %v317 = vsel %vm267, %v250, 0
      %v320 = vsel %vm267, %v251, 0
      %v323 = vsel %vm267, %v252, 0
      %v326 = vsel %vm267, %v253, 0
      %v329 = vsel %vm267, %v254, 0
      %v332 = vsel %vm267, %v255, 0
      %v335 = vsel %vm267, %v256, 0
      %v338 = vsel %vm267, %v257, 0
      %v341 = vsel %vm267, %v258, 0
      %v344 = vsel %vm267, %v259, 0
      %v347 = vsel %vm267, %v260, 0
      %v350 = vsel %vm267, %v261, 0
      %v353 = vsel %vm267, %v262, 0
      %v356 = vsel %vm267, %v263, 0
      %v359 = vsel %vm267, %v264, 0
      %v362 = vsel %vm267, %v265, 0
      %364 = vmatprep.subr.mxu0 0.0
      %365 = vmatpush1.msra.mxu0 0.0
      %366 = vmatprep.subr.mxu0 0.0
      %367 = vmatpush1.msra.mxu0 0.0
      %368 = vmatprep.subr.mxu0 0.0
      %369 = vmatpush1.msra.mxu0 0.0
      %370 = vmatprep.subr.mxu0 0.0
      %371 = vmatpush1.msra.mxu0 0.0
      %372 = vmatprep.subr.mxu0 0.0
      %373 = vmatpush1.msra.mxu0 0.0
      %374 = vmatprep.subr.mxu0 0.0
      %375 = vmatpush1.msra.mxu0 0.0
      %376 = vmatprep.subr.mxu0 0.0
      %377 = vmatpush1.msra.mxu0 0.0
      %378 = vmatprep.subr.mxu0 0.0
      %379 = vmatpush1.msra.mxu0 0.0
      %380 = vmatprep.subr.mxu0 0.0
      %381 = vmatpush1.msra.mxu0 0.0
      %382 = vmatprep.subr.mxu0 0.0
      %383 = vmatpush1.msra.mxu0 0.0
      %384 = vmatprep.subr.mxu0 0.0
      %385 = vmatpush1.msra.mxu0 0.0
      %386 = vmatprep.subr.mxu0 0.0
      %387 = vmatpush1.msra.mxu0 0.0
      %388 = vmatprep.subr.mxu0 0.0
      %389 = vmatpush1.msra.mxu0 0.0
      %390 = vmatprep.subr.mxu0 0.0
      %391 = vmatpush1.msra.mxu0 0.0
      %392 = vmatprep.subr.mxu0 0.0
      %393 = vmatpush1.msra.mxu0 0.0
      %394 = vmatprep.subr.mxu0 0.0
      %395 = vmatpush1.msra.mxu0 %v266
      %396 = vmatprep.subr.mxu0 0.0
      %397 = vmatpush2.msra.mxu0 0.0
      %398 = vmatprep.subr.mxu0 0.0
      %399 = vmatpush2.msra.mxu0 0.0
      %400 = vmatprep.subr.mxu0 0.0
      %401 = vmatpush2.msra.mxu0 0.0
      %402 = vmatprep.subr.mxu0 0.0
      %403 = vmatpush2.msra.mxu0 0.0
      %404 = vmatprep.subr.mxu0 0.0
      %405 = vmatpush2.msra.mxu0 0.0
      %406 = vmatprep.subr.mxu0 0.0
      %407 = vmatpush2.msra.mxu0 0.0
      %408 = vmatprep.subr.mxu0 0.0
      %409 = vmatpush2.msra.mxu0 0.0
      %410 = vmatprep.subr.mxu0 0.0
      %411 = vmatpush2.msra.mxu0 0.0
      %412 = vmatprep.subr.mxu0 0.0
      %413 = vmatpush2.msra.mxu0 0.0
      %414 = vmatprep.subr.mxu0 0.0
      %415 = vmatpush2.msra.mxu0 0.0
      %416 = vmatprep.subr.mxu0 0.0
      %417 = vmatpush2.msra.mxu0 0.0
      %418 = vmatprep.subr.mxu0 0.0
      %419 = vmatpush2.msra.mxu0 0.0
      %420 = vmatprep.subr.mxu0 0.0
      %421 = vmatpush2.msra.mxu0 0.0
      %422 = vmatprep.subr.mxu0 0.0
      %423 = vmatpush2.msra.mxu0 0.0
      %424 = vmatprep.subr.mxu0 0.0
      %425 = vmatpush2.msra.mxu0 0.0
      %426 = vmatprep.subr.mxu0 0.0
      %427 = vmatpush2.msra.mxu0 0.0
      %428 = vmatprep.mubr.f32.mxu0 0.0
      %429 = vmatmul.mubr.f32.gmra.mxu0 %v269
      %v430 = vpop.f32.mrf.mxu0
      %v431 = vadd.f32 0.0, %v430
      %v432 = vpop.f32.mrf.mxu0
      %433 = vmatprep.mubr.f32.mxu0 0.0
      %434 = vmatmul.mubr.f32.gmra.mxu0 %v272
      %v435 = vpop.f32.mrf.mxu0
      %v436 = vadd.f32 0.0, %v435
      %v437 = vpop.f32.mrf.mxu0
      %438 = vmatprep.mubr.f32.mxu0 0.0
      %439 = vmatmul.mubr.f32.gmra.mxu0 %v275
      %v440 = vpop.f32.mrf.mxu0
      %v441 = vadd.f32 0.0, %v440
      %v442 = vpop.f32.mrf.mxu0
      %443 = vmatprep.mubr.f32.mxu0 0.0
      %444 = vmatmul.mubr.f32.gmra.mxu0 %v278
      %v445 = vpop.f32.mrf.mxu0
      %v446 = vadd.f32 0.0, %v445
      %v447 = vpop.f32.mrf.mxu0
      %448 = vmatprep.mubr.f32.mxu0 0.0
      %449 = vmatmul.mubr.f32.gmra.mxu0 %v281
      %v450 = vpop.f32.mrf.mxu0
      %v451 = vadd.f32 0.0, %v450
      %v452 = vpop.f32.mrf.mxu0
      %453 = vmatprep.mubr.f32.mxu0 0.0
      %454 = vmatmul.mubr.f32.gmra.mxu0 %v284
      %v455 = vpop.f32.mrf.mxu0
      %v456 = vadd.f32 0.0, %v455
      %v457 = vpop.f32.mrf.mxu0
      %458 = vmatprep.mubr.f32.mxu0 0.0
      %459 = vmatmul.mubr.f32.gmra.mxu0 %v287
      %v460 = vpop.f32.mrf.mxu0
      %v461 = vadd.f32 0.0, %v460
      %v462 = vpop.f32.mrf.mxu0
      %463 = vmatprep.mubr.f32.mxu0 0.0
      %464 = vmatmul.mubr.f32.gmra.mxu0 %v290
      %v465 = vpop.f32.mrf.mxu0
      %v466 = vadd.f32 0.0, %v465
      %v467 = vpop.f32.mrf.mxu0
      %468 = vmatprep.mubr.f32.mxu0 0.0
      %469 = vmatmul.mubr.f32.gmra.mxu0 %v293
      %v470 = vpop.f32.mrf.mxu0
      %v471 = vadd.f32 0.0, %v470
      %v472 = vpop.f32.mrf.mxu0
      %473 = vmatprep.mubr.f32.mxu0 0.0
      %474 = vmatmul.mubr.f32.gmra.mxu0 %v296
      %v475 = vpop.f32.mrf.mxu0
      %v476 = vadd.f32 0.0, %v475
      %v477 = vpop.f32.mrf.mxu0
      %478 = vmatprep.mubr.f32.mxu0 0.0
      %479 = vmatmul.mubr.f32.gmra.mxu0 %v299
      %v480 = vpop.f32.mrf.mxu0
      %v481 = vadd.f32 0.0, %v480
      %v482 = vpop.f32.mrf.mxu0
      %483 = vmatprep.mubr.f32.mxu0 0.0
      %484 = vmatmul.mubr.f32.gmra.mxu0 %v302
      %v485 = vpop.f32.mrf.mxu0
      %v486 = vadd.f32 0.0, %v485
      %v487 = vpop.f32.mrf.mxu0
      %488 = vmatprep.mubr.f32.mxu0 0.0
      %489 = vmatmul.mubr.f32.gmra.mxu0 %v305
      %v490 = vpop.f32.mrf.mxu0
      %v491 = vadd.f32 0.0, %v490
      %v492 = vpop.f32.mrf.mxu0
      %493 = vmatprep.mubr.f32.mxu0 0.0
      %494 = vmatmul.mubr.f32.gmra.mxu0 %v308
      %v495 = vpop.f32.mrf.mxu0
      %v496 = vadd.f32 0.0, %v495
      %v497 = vpop.f32.mrf.mxu0
      %498 = vmatprep.mubr.f32.mxu0 0.0
      %499 = vmatmul.mubr.f32.gmra.mxu0 %v311
      %v500 = vpop.f32.mrf.mxu0
      %v501 = vadd.f32 0.0, %v500
      %v502 = vpop.f32.mrf.mxu0
      %503 = vmatprep.mubr.f32.mxu0 0.0
      %504 = vmatmul.mubr.f32.gmra.mxu0 %v314
      %v505 = vpop.f32.mrf.mxu0
      %v506 = vadd.f32 0.0, %v505
      %v507 = vpop.f32.mrf.mxu0
      %508 = vmatprep.mubr.f32.mxu0 0.0
      %509 = vmatmul.mubr.f32.gmra.mxu0 %v317
      %v510 = vpop.f32.mrf.mxu0
      %v511 = vadd.f32 0.0, %v510
      %v512 = vpop.f32.mrf.mxu0
      %513 = vmatprep.mubr.f32.mxu0 0.0
      %514 = vmatmul.mubr.f32.gmra.mxu0 %v320
      %v515 = vpop.f32.mrf.mxu0
      %v516 = vadd.f32 0.0, %v515
      %v517 = vpop.f32.mrf.mxu0
      %518 = vmatprep.mubr.f32.mxu0 0.0
      %519 = vmatmul.mubr.f32.gmra.mxu0 %v323
      %v520 = vpop.f32.mrf.mxu0
      %v521 = vadd.f32 0.0, %v520
      %v522 = vpop.f32.mrf.mxu0
      %523 = vmatprep.mubr.f32.mxu0 0.0
      %524 = vmatmul.mubr.f32.gmra.mxu0 %v326
      %v525 = vpop.f32.mrf.mxu0
      %v526 = vadd.f32 0.0, %v525
      %v527 = vpop.f32.mrf.mxu0
      %528 = vmatprep.mubr.f32.mxu0 0.0
      %529 = vmatmul.mubr.f32.gmra.mxu0 %v329
      %v530 = vpop.f32.mrf.mxu0
      %v531 = vadd.f32 0.0, %v530
      %v532 = vpop.f32.mrf.mxu0
      %533 = vmatprep.mubr.f32.mxu0 0.0
      %534 = vmatmul.mubr.f32.gmra.mxu0 %v332
      %v535 = vpop.f32.mrf.mxu0
      %v536 = vadd.f32 0.0, %v535
      %v537 = vpop.f32.mrf.mxu0
      %538 = vmatprep.mubr.f32.mxu0 0.0
      %539 = vmatmul.mubr.f32.gmra.mxu0 %v335
      %v540 = vpop.f32.mrf.mxu0
      %v541 = vadd.f32 0.0, %v540
      %v542 = vpop.f32.mrf.mxu0
      %543 = vmatprep.mubr.f32.mxu0 0.0
      %544 = vmatmul.mubr.f32.gmra.mxu0 %v338
      %v545 = vpop.f32.mrf.mxu0
      %v546 = vadd.f32 0.0, %v545
      %v547 = vpop.f32.mrf.mxu0
      %548 = vmatprep.mubr.f32.mxu0 0.0
      %549 = vmatmul.mubr.f32.gmra.mxu0 %v341
      %v550 = vpop.f32.mrf.mxu0
      %v551 = vadd.f32 0.0, %v550
      %v552 = vpop.f32.mrf.mxu0
      %553 = vmatprep.mubr.f32.mxu0 0.0
      %554 = vmatmul.mubr.f32.gmra.mxu0 %v344
      %v555 = vpop.f32.mrf.mxu0
      %v556 = vadd.f32 0.0, %v555
      %v557 = vpop.f32.mrf.mxu0
      %558 = vmatprep.mubr.f32.mxu0 0.0
      %559 = vmatmul.mubr.f32.gmra.mxu0 %v347
      %v560 = vpop.f32.mrf.mxu0
      %v561 = vadd.f32 0.0, %v560
      %v562 = vpop.f32.mrf.mxu0
      %563 = vmatprep.mubr.f32.mxu0 0.0
      %564 = vmatmul.mubr.f32.gmra.mxu0 %v350
      %v565 = vpop.f32.mrf.mxu0
      %v566 = vadd.f32 0.0, %v565
      %v567 = vpop.f32.mrf.mxu0
      %568 = vmatprep.mubr.f32.mxu0 0.0
      %569 = vmatmul.mubr.f32.gmra.mxu0 %v353
      %v570 = vpop.f32.mrf.mxu0
      %v571 = vadd.f32 0.0, %v570
      %v572 = vpop.f32.mrf.mxu0
      %573 = vmatprep.mubr.f32.mxu0 0.0
      %574 = vmatmul.mubr.f32.gmra.mxu0 %v356
      %v575 = vpop.f32.mrf.mxu0
      %v576 = vadd.f32 0.0, %v575
      %v577 = vpop.f32.mrf.mxu0
      %578 = vmatprep.mubr.f32.mxu0 0.0
      %579 = vmatmul.mubr.f32.gmra.mxu0 %v359
      %v580 = vpop.f32.mrf.mxu0
      %v581 = vadd.f32 0.0, %v580
      %v582 = vpop.f32.mrf.mxu0
      %583 = vmatprep.mubr.f32.mxu0 0.0
      %584 = vmatmul.mubr.f32.gmra.mxu0 %v362
      %v585 = vpop.f32.mrf.mxu0
      %v586 = vadd.f32 0.0, %v585
      %v587 = vpop.f32.mrf.mxu0
      %588 = vdwg.mxu0
      %v589 = vld [vmem:[%s2] sm:$0x1]
      %v590 = vld [vmem:[%s3] sm:$0x1]
      %v591 = vadd.f32 %v431, %v436
      %v592 = vadd.f32 %v591, %v441
      %v593 = vadd.f32 %v592, %v446
      %v594 = vadd.f32 %v593, %v451
      %v595 = vadd.f32 %v594, %v456
      %v596 = vadd.f32 %v595, %v461
      %v597 = vadd.f32 %v596, %v466
      %v598 = vadd.f32 %v597, %v471
      %v599 = vadd.f32 %v598, %v476
      %v600 = vadd.f32 %v599, %v481
      %v601 = vadd.f32 %v600, %v486
      %v602 = vadd.f32 %v601, %v491
      %v603 = vadd.f32 %v602, %v496
      %v604 = vadd.f32 %v603, %v501
      %v605 = vadd.f32 %v604, %v506
      %v606 = vadd.f32 %v605, %v511
      %v607 = vadd.f32 %v606, %v516
      %v608 = vadd.f32 %v607, %v521
      %v609 = vadd.f32 %v608, %v526
      %v610 = vadd.f32 %v609, %v531
      %v611 = vadd.f32 %v610, %v536
      %v612 = vadd.f32 %v611, %v541
      %v613 = vadd.f32 %v612, %v546
      %v614 = vadd.f32 %v613, %v551
      %v615 = vadd.f32 %v614, %v556
      %v616 = vadd.f32 %v615, %v561
      %v617 = vadd.f32 %v616, %v566
      %v618 = vadd.f32 %v617, %v571
      %v619 = vadd.f32 %v618, %v576
      %v620 = vadd.f32 %v619, %v581
      %v621 = vadd.f32 %v620, %v586
      %v622 = vrot.slane %v621, 4
      %v623 = vadd.f32 %v621, %v622
      %v624 = vrot.slane %v623, 2
      %v625 = vadd.f32 %v623, %v624
      %v626 = vrot.slane %v625, 1
      %v627 = vadd.f32 %v625, %v626
      %v628 = vrcp.pop 256.0
      %v629 = vmul.f32 %v627, %v628
      %v630 = vsub.f32 %v431, %v629
      %v631 = vsub.f32 %v436, %v629
      %v632 = vsub.f32 %v441, %v629
      %v633 = vsub.f32 %v446, %v629
      %v634 = vsub.f32 %v451, %v629
      %v635 = vsub.f32 %v456, %v629
      %v636 = vsub.f32 %v461, %v629
      %v637 = vsub.f32 %v466, %v629
      %v638 = vsub.f32 %v471, %v629
      %v639 = vsub.f32 %v476, %v629
      %v640 = vsub.f32 %v481, %v629
      %v641 = vsub.f32 %v486, %v629
      %v642 = vsub.f32 %v491, %v629
      %v643 = vsub.f32 %v496, %v629
      %v644 = vsub.f32 %v501, %v629
      %v645 = vsub.f32 %v506, %v629
      %v646 = vsub.f32 %v511, %v629
      %v647 = vsub.f32 %v516, %v629
      %v648 = vsub.f32 %v521, %v629
      %v649 = vsub.f32 %v526, %v629
      %v650 = vsub.f32 %v531, %v629
      %v651 = vsub.f32 %v536, %v629
      %v652 = vsub.f32 %v541, %v629
      %v653 = vsub.f32 %v546, %v629
      %v654 = vsub.f32 %v551, %v629
      %v655 = vsub.f32 %v556, %v629
      %v656 = vsub.f32 %v561, %v629
      %v657 = vsub.f32 %v566, %v629
      %v658 = vsub.f32 %v571, %v629
      %v659 = vsub.f32 %v576, %v629
      %v660 = vsub.f32 %v581, %v629
      %v661 = vsub.f32 %v586, %v629
      %v662 = vmul.f32 %v630, %v630
      %v663 = vmul.f32 %v631, %v631
      %v664 = vmul.f32 %v632, %v632
      %v665 = vmul.f32 %v633, %v633
      %v666 = vmul.f32 %v634, %v634
      %v667 = vmul.f32 %v635, %v635
      %v668 = vmul.f32 %v636, %v636
      %v669 = vmul.f32 %v637, %v637
      %v670 = vmul.f32 %v638, %v638
      %v671 = vmul.f32 %v639, %v639
      %v672 = vmul.f32 %v640, %v640
      %v673 = vmul.f32 %v641, %v641
      %v674 = vmul.f32 %v642, %v642
      %v675 = vmul.f32 %v643, %v643
      %v676 = vmul.f32 %v644, %v644
      %v677 = vmul.f32 %v645, %v645
      %v678 = vmul.f32 %v646, %v646
      %v679 = vmul.f32 %v647, %v647
      %v680 = vmul.f32 %v648, %v648
      %v681 = vmul.f32 %v649, %v649
      %v682 = vmul.f32 %v650, %v650
      %v683 = vmul.f32 %v651, %v651
      %v684 = vmul.f32 %v652, %v652
      %v685 = vmul.f32 %v653, %v653
      %v686 = vmul.f32 %v654, %v654
      %v687 = vmul.f32 %v655, %v655
      %v688 = vmul.f32 %v656, %v656
      %v689 = vmul.f32 %v657, %v657
      %v690 = vmul.f32 %v658, %v658
      %v691 = vmul.f32 %v659, %v659
      %v692 = vmul.f32 %v660, %v660
      %v693 = vmul.f32 %v661, %v661
      %v694 = vadd.f32 %v662, %v663
      %v695 = vadd.f32 %v694, %v664
      %v696 = vadd.f32 %v695, %v665
      %v697 = vadd.f32 %v696, %v666
      %v698 = vadd.f32 %v697, %v667
      %v699 = vadd.f32 %v698, %v668
      %v700 = vadd.f32 %v699, %v669
      %v701 = vadd.f32 %v700, %v670
      %v702 = vadd.f32 %v701, %v671
      %v703 = vadd.f32 %v702, %v672
      %v704 = vadd.f32 %v703, %v673
      %v705 = vadd.f32 %v704, %v674
      %v706 = vadd.f32 %v705, %v675
      %v707 = vadd.f32 %v706, %v676
      %v708 = vadd.f32 %v707, %v677
      %v709 = vadd.f32 %v708, %v678
      %v710 = vadd.f32 %v709, %v679
      %v711 = vadd.f32 %v710, %v680
      %v712 = vadd.f32 %v711, %v681
      %v713 = vadd.f32 %v712, %v682
      %v714 = vadd.f32 %v713, %v683
      %v715 = vadd.f32 %v714, %v684
      %v716 = vadd.f32 %v715, %v685
      %v717 = vadd.f32 %v716, %v686
      %v718 = vadd.f32 %v717, %v687
      %v719 = vadd.f32 %v718, %v688
      %v720 = vadd.f32 %v719, %v689
      %v721 = vadd.f32 %v720, %v690
      %v722 = vadd.f32 %v721, %v691
      %v723 = vadd.f32 %v722, %v692
      %v724 = vadd.f32 %v723, %v693
      %v725 = vrot.slane %v724, 4
      %v726 = vadd.f32 %v724, %v725
      %v727 = vrot.slane %v726, 2
      %v728 = vadd.f32 %v726, %v727
      %v729 = vrot.slane %v728, 1
      %v730 = vadd.f32 %v728, %v729
      %v731 = vmul.f32 %v730, %v628
      %v732 = vadd.f32 %v731, 1e-05
      %v733 = vrsqrt.pop %v732
      %v734 = vmul.f32 %v630, %v733
      %v735 = vmul.f32 %v631, %v733
      %v736 = vmul.f32 %v632, %v733
      %v737 = vmul.f32 %v633, %v733
      %v738 = vmul.f32 %v634, %v733
      %v739 = vmul.f32 %v635, %v733
      %v740 = vmul.f32 %v636, %v733
      %v741 = vmul.f32 %v637, %v733
      %v742 = vmul.f32 %v638, %v733
      %v743 = vmul.f32 %v639, %v733
      %v744 = vmul.f32 %v640, %v733
      %v745 = vmul.f32 %v641, %v733
      %v746 = vmul.f32 %v642, %v733
      %v747 = vmul.f32 %v643, %v733
      %v748 = vmul.f32 %v644, %v733
      %v749 = vmul.f32 %v645, %v733
      %v750 = vmul.f32 %v646, %v733
      %v751 = vmul.f32 %v647, %v733
      %v752 = vmul.f32 %v648, %v733
      %v753 = vmul.f32 %v649, %v733
      %v754 = vmul.f32 %v650, %v733
      %v755 = vmul.f32 %v651, %v733
      %v756 = vmul.f32 %v652, %v733
      %v757 = vmul.f32 %v653, %v733
      %v758 = vmul.f32 %v654, %v733
      %v759 = vmul.f32 %v655, %v733
      %v760 = vmul.f32 %v656, %v733
      %v761 = vmul.f32 %v657, %v733
      %v762 = vmul.f32 %v658, %v733
      %v763 = vmul.f32 %v659, %v733
      %v764 = vmul.f32 %v660, %v733
      %v765 = vmul.f32 %v661, %v733
      %v767 = vlaneseq
      %v768 = vshrl.u32 %v767, 7
      %v769 = vsub.s32 0, %v768
      %v770 = vrot.slane %v589, %v769
      %v772 = vmul.f32 %v734, %v770
      %v773 = vmul.f32 %v735, %v770
      %v774 = vmul.f32 %v736, %v770
      %v775 = vmul.f32 %v737, %v770
      %v776 = vmul.f32 %v738, %v770
      %v777 = vmul.f32 %v739, %v770
      %v778 = vmul.f32 %v740, %v770
      %v779 = vmul.f32 %v741, %v770
      %v780 = vmul.f32 %v742, %v770
      %v781 = vmul.f32 %v743, %v770
      %v782 = vmul.f32 %v744, %v770
      %v783 = vmul.f32 %v745, %v770
      %v784 = vmul.f32 %v746, %v770
      %v785 = vmul.f32 %v747, %v770
      %v786 = vmul.f32 %v748, %v770
      %v787 = vmul.f32 %v749, %v770
      %v788 = vmul.f32 %v750, %v770
      %v789 = vmul.f32 %v751, %v770
      %v790 = vmul.f32 %v752, %v770
      %v791 = vmul.f32 %v753, %v770
      %v792 = vmul.f32 %v754, %v770
      %v793 = vmul.f32 %v755, %v770
      %v794 = vmul.f32 %v756, %v770
      %v795 = vmul.f32 %v757, %v770
      %v796 = vmul.f32 %v758, %v770
      %v797 = vmul.f32 %v759, %v770
      %v798 = vmul.f32 %v760, %v770
      %v799 = vmul.f32 %v761, %v770
      %v800 = vmul.f32 %v762, %v770
      %v801 = vmul.f32 %v763, %v770
      %v802 = vmul.f32 %v764, %v770
      %v803 = vmul.f32 %v765, %v770
      %v805 = vlaneseq
      %v806 = vshrl.u32 %v805, 7
      %v807 = vsub.s32 0, %v806
      %v808 = vrot.slane %v590, %v807
      %v810 = vadd.f32 %v772, %v808
      %v811 = vadd.f32 %v773, %v808
      %v812 = vadd.f32 %v774, %v808
      %v813 = vadd.f32 %v775, %v808
      %v814 = vadd.f32 %v776, %v808
      %v815 = vadd.f32 %v777, %v808
      %v816 = vadd.f32 %v778, %v808
      %v817 = vadd.f32 %v779, %v808
      %v818 = vadd.f32 %v780, %v808
      %v819 = vadd.f32 %v781, %v808
      %v820 = vadd.f32 %v782, %v808
      %v821 = vadd.f32 %v783, %v808
      %v822 = vadd.f32 %v784, %v808
      %v823 = vadd.f32 %v785, %v808
      %v824 = vadd.f32 %v786, %v808
      %v825 = vadd.f32 %v787, %v808
      %v826 = vadd.f32 %v788, %v808
      %v827 = vadd.f32 %v789, %v808
      %v828 = vadd.f32 %v790, %v808
      %v829 = vadd.f32 %v791, %v808
      %v830 = vadd.f32 %v792, %v808
      %v831 = vadd.f32 %v793, %v808
      %v832 = vadd.f32 %v794, %v808
      %v833 = vadd.f32 %v795, %v808
      %v834 = vadd.f32 %v796, %v808
      %v835 = vadd.f32 %v797, %v808
      %v836 = vadd.f32 %v798, %v808
      %v837 = vadd.f32 %v799, %v808
      %v838 = vadd.f32 %v800, %v808
      %v839 = vadd.f32 %v801, %v808
      %v840 = vadd.f32 %v802, %v808
      %v841 = vadd.f32 %v803, %v808
      %842 = vst [vmem:[%s230] sm:$0xff] %v810
      %843 = vst [vmem:[%s230 + $0x8] sm:$0xff] %v811
      %844 = vst [vmem:[%s230 + $0x10] sm:$0xff] %v812
      %845 = vst [vmem:[%s230 + $0x18] sm:$0xff] %v813
      %846 = vst [vmem:[%s230 + $0x20] sm:$0xff] %v814
      %847 = vst [vmem:[%s230 + $0x28] sm:$0xff] %v815
      %848 = vst [vmem:[%s230 + $0x30] sm:$0xff] %v816
      %849 = vst [vmem:[%s230 + $0x38] sm:$0xff] %v817
      %850 = vst [vmem:[%s230 + $0x40] sm:$0xff] %v818
      %851 = vst [vmem:[%s230 + $0x48] sm:$0xff] %v819
      %852 = vst [vmem:[%s230 + $0x50] sm:$0xff] %v820
      %853 = vst [vmem:[%s230 + $0x58] sm:$0xff] %v821
      %854 = vst [vmem:[%s230 + $0x60] sm:$0xff] %v822
      %855 = vst [vmem:[%s230 + $0x68] sm:$0xff] %v823
      %856 = vst [vmem:[%s230 + $0x70] sm:$0xff] %v824
      %857 = vst [vmem:[%s230 + $0x78] sm:$0xff] %v825
      %858 = vst [vmem:[%s230 + $0x80] sm:$0xff] %v826
      %859 = vst [vmem:[%s230 + $0x88] sm:$0xff] %v827
      %860 = vst [vmem:[%s230 + $0x90] sm:$0xff] %v828
      %861 = vst [vmem:[%s230 + $0x98] sm:$0xff] %v829
      %862 = vst [vmem:[%s230 + $0xa0] sm:$0xff] %v830
      %863 = vst [vmem:[%s230 + $0xa8] sm:$0xff] %v831
      %864 = vst [vmem:[%s230 + $0xb0] sm:$0xff] %v832
      %865 = vst [vmem:[%s230 + $0xb8] sm:$0xff] %v833
      %866 = vst [vmem:[%s230 + $0xc0] sm:$0xff] %v834
      %867 = vst [vmem:[%s230 + $0xc8] sm:$0xff] %v835
      %868 = vst [vmem:[%s230 + $0xd0] sm:$0xff] %v836
      %869 = vst [vmem:[%s230 + $0xd8] sm:$0xff] %v837
      %870 = vst [vmem:[%s230 + $0xe0] sm:$0xff] %v838
      %871 = vst [vmem:[%s230 + $0xe8] sm:$0xff] %v839
      %872 = vst [vmem:[%s230 + $0xf0] sm:$0xff] %v840
      %873 = vst [vmem:[%s230 + $0xf8] sm:$0xff] %v841
      %v874 = vand.u32 2147483647, %v810
      %v875 = vand.u32 2147483647, %v811
      %v876 = vand.u32 2147483647, %v812
      %v877 = vand.u32 2147483647, %v813
      %v878 = vand.u32 2147483647, %v814
      %v879 = vand.u32 2147483647, %v815
      %v880 = vand.u32 2147483647, %v816
      %v881 = vand.u32 2147483647, %v817
      %v882 = vand.u32 2147483647, %v818
      %v883 = vand.u32 2147483647, %v819
      %v884 = vand.u32 2147483647, %v820
      %v885 = vand.u32 2147483647, %v821
      %v886 = vand.u32 2147483647, %v822
      %v887 = vand.u32 2147483647, %v823
      %v888 = vand.u32 2147483647, %v824
      %v889 = vand.u32 2147483647, %v825
      %v890 = vand.u32 2147483647, %v826
      %v891 = vand.u32 2147483647, %v827
      %v892 = vand.u32 2147483647, %v828
      %v893 = vand.u32 2147483647, %v829
      %v894 = vand.u32 2147483647, %v830
      %v895 = vand.u32 2147483647, %v831
      %v896 = vand.u32 2147483647, %v832
      %v897 = vand.u32 2147483647, %v833
      %v898 = vand.u32 2147483647, %v834
      %v899 = vand.u32 2147483647, %v835
      %v900 = vand.u32 2147483647, %v836
      %v901 = vand.u32 2147483647, %v837
      %v902 = vand.u32 2147483647, %v838
      %v903 = vand.u32 2147483647, %v839
      %v904 = vand.u32 2147483647, %v840
      %v905 = vand.u32 2147483647, %v841
      %v906 = vmax.f32 %v874, %v878
      %v907 = vmax.f32 %v875, %v879
      %v908 = vmax.f32 %v876, %v880
      %v909 = vmax.f32 %v877, %v881
      %v910 = vmax.f32 %v906, %v882
      %v911 = vmax.f32 %v907, %v883
      %v912 = vmax.f32 %v908, %v884
      %v913 = vmax.f32 %v909, %v885
      %v914 = vmax.f32 %v910, %v886
      %v915 = vmax.f32 %v911, %v887
      %v916 = vmax.f32 %v912, %v888
      %v917 = vmax.f32 %v913, %v889
      %v918 = vmax.f32 %v914, %v890
      %v919 = vmax.f32 %v915, %v891
      %v920 = vmax.f32 %v916, %v892
      %v921 = vmax.f32 %v917, %v893
      %v922 = vmax.f32 %v918, %v894
      %v923 = vmax.f32 %v919, %v895
      %v924 = vmax.f32 %v920, %v896
      %v925 = vmax.f32 %v921, %v897
      %v926 = vmax.f32 %v922, %v898
      %v927 = vmax.f32 %v923, %v899
      %v928 = vmax.f32 %v924, %v900
      %v929 = vmax.f32 %v925, %v901
      %v930 = vmax.f32 %v926, %v902
      %v931 = vmax.f32 %v927, %v903
      %v932 = vmax.f32 %v928, %v904
      %v933 = vmax.f32 %v929, %v905
      %v934 = vmax.f32 %v930, %v931
      %v935 = vmax.f32 %v932, %v933
      %v936 = vmax.f32 %v934, %v935
      %v937 = vrot.slane %v936, 4
      %v938 = vmax.f32 %v936, %v937
      %v939 = vrot.slane %v938, 2
      %v940 = vmax.f32 %v938, %v939
      %v941 = vrot.slane %v940, 1
      %v942 = vmax.f32 %v940, %v941
      %943 = vst [vmem:[%s233] sm:$0x1] %v942
      %p944 = scmp.lt.s32.totalorder %s17, 1
      %s945 = scalar_select %p944, %s17, 1
      %s946 = smul.addr %s945, 32
      %s947 = smul.addr %s946, 8
      %s948 = scalar_lea.vmem %s4, %s947
      %p949 = scmp.lt.s32.totalorder %s17, 1
      %s950 = scalar_select %p949, %s17, 1
      %s951 = scalar_lea.vmem %s5, %s950
      // Predicated region
      $region37: #{qbottleneck_ins_forward.3} parent=35 // pred_check
        %p952 = pneg %p124
      $region38: #{qbottleneck_ins_forward.3} parent=35 // pred_check_branch
        %954 = sbr.rel (%p952) target = $region40
      $region39: #{qbottleneck_ins_forward.3} parent=35 // pred_region
        _
      $region40: #{qbottleneck_ins_forward.3} parent=35 // pred_fallthru
        _
      // Predicated region
      $region41: #{qbottleneck_ins_forward.3} parent=35 // pred_check
        %p955 = pneg %p150
      $region42: #{qbottleneck_ins_forward.3} parent=35 // pred_check_branch
        %957 = sbr.rel (%p955) target = $region44
      $region43: #{qbottleneck_ins_forward.3} parent=35 // pred_region
        _
      $region44: #{qbottleneck_ins_forward.3} parent=35 // pred_fallthru
        _
    $region36: #{qbottleneck_ins_forward.3} parent=5 // pred_fallthru
      _
    %p958 = scmp.le.s32.totalorder 2, %s12
    // Predicated region
    $region45: #{qbottleneck_ins_forward.3} parent=5 // pred_check
      %p959 = pneg %p958
    $region46: #{qbottleneck_ins_forward.3} parent=5 // pred_check_branch
      %961 = sbr.rel (%p959) target = $region48
    $region47: #{qbottleneck_ins_forward.3} parent=5 // pred_region
      %s962 = ssub.s32 %s12, 2
      // Predicated region
      $region49: #{qbottleneck_ins_forward.3} parent=47 // pred_check
        %p963 = pneg %p130
      $region50: #{qbottleneck_ins_forward.3} parent=47 // pred_check_branch
        %965 = sbr.rel (%p963) target = $region52
      $region51: #{qbottleneck_ins_forward.3} parent=47 // pred_region
        %p966 = scmp.lt.s32.totalorder %s18, 1
        %s967 = scalar_select %p966, %s18, 1
        %s968 = smul.addr %s967, 32
        %s969 = smul.addr %s968, 8
        %s970 = scalar_lea.vmem %s4, %s969
      $region52: #{qbottleneck_ins_forward.3} parent=47 // pred_fallthru
        _
      // Predicated region
      $region53: #{qbottleneck_ins_forward.3} parent=47 // pred_check
        %p971 = pneg %p156
      $region54: #{qbottleneck_ins_forward.3} parent=47 // pred_check_branch
        %973 = sbr.rel (%p971) target = $region56
      $region55: #{qbottleneck_ins_forward.3} parent=47 // pred_region
        %p974 = scmp.lt.s32.totalorder %s18, 1
        %s975 = scalar_select %p974, %s18, 1
        %s976 = scalar_lea.vmem %s5, %s975
      $region56: #{qbottleneck_ins_forward.3} parent=47 // pred_fallthru
        _
    $region48: #{qbottleneck_ins_forward.3} parent=5 // pred_fallthru
      _
  $region6: #{qbottleneck_ins_forward.3} parent=0 // loop_footer
    %s16 = sadd.s32 1, %s12
  $region7: #{qbottleneck_ins_forward.3} parent=0 // loop_footer_branch
    %11 = sbr.rel target = $region3
  $region8: #{qbottleneck_ins_forward.3} parent=0 // loop_exit
    _

// kernel: qbottleneck_ins_forward.5
$region0: #{qbottleneck_ins_forward.5}
  #allocation0 [shape = 'u32[]', space=smem, size = 0x4, offset = 0x4, fixed_abs, tag = 'smem constant byte address 0x4 - core index']
  #allocation1 [shape = 'u32[144,128]{1,0:T(1,128)}', space=vmem, size = 0x12000, scoped, tag = 'internal scratch']
  #allocation2 [shape = 'f32[1]{0:T(128)S(6)}', space=smem, size = 0x200, scoped, tag = 'scoped memory for qbottleneck_ins_forward.5']
  %s0 = inlined_call_operand.<no memory space> [shape: f32[1], index: 0, kind: input, shape index: {}]
  %s1 = inlined_call_operand.vmem [shape: f32[2,64,128], index: 1, kind: input, shape index: {}]
  %s2 = inlined_call_operand.vmem [shape: f32[128,128], index: 2, kind: input, shape index: {}]
  %s3 = inlined_call_operand.vmem [shape: f32[1,128], index: 3, kind: input, shape index: {}]
  %s4 = inlined_call_operand.vmem [shape: f32[1,128], index: 4, kind: input, shape index: {}]
  %s5 = inlined_call_operand.vmem [shape: f32[2,64,8], index: 5, kind: input, shape index: {}]
  %s6 = inlined_call_operand.vmem [shape: f32[8,128], index: 6, kind: input, shape index: {}]
  %s7 = inlined_call_operand.vmem [shape: f32[1,128], index: 7, kind: input, shape index: {}]
  %s8 = inlined_call_operand.vmem [shape: f32[1,128], index: 8, kind: input, shape index: {}]
  %s9 = inlined_call_operand.vmem [shape: f32[2,64,128], index: 9, kind: output, shape index: {}]
  %s10 = sld [smem:[#allocation0]]
  $region69: #{qbottleneck_ins_forward.5} parent=0
    _
  %s12 = ssub.s32 1, %s10
  %s13 = scalar_select 0, %s12, %s10
  %14 = sst [smem:[#allocation2]] %s0
  loop: start=0, step=1, limit=4
  $region2: #{qbottleneck_ins_forward.5} parent=0 // loop_pre_header
    _
  $region3: #{qbottleneck_ins_forward.5} parent=0 // loop_header
    %s16 = sphi 0, %s20
    %p17 = scmp.ge.s32.totalorder %s16, 4
    %s24 = sphi 0, %s24
    %s26 = sphi 0, %s24
    %s27 = sphi 0, %s26
    %s41 = sphi 0, %s27
    %s47 = sphi 0, %s49
    %s50 = sphi 0, %s47
    %s51 = sphi 0, %s50
    %s67 = sphi 0, %s51
    %s71 = sphi 0, %s71
    %s73 = sphi 0, %s71
    %s74 = sphi 0, %s73
    %s88 = sphi 0, %s74
    %s92 = sphi 0, %s92
    %s94 = sphi 0, %s92
    %s95 = sphi 0, %s94
    %s109 = sphi 0, %s95
    %s113 = sphi 0, %s113
    %s115 = sphi 0, %s113
    %s116 = sphi 0, %s115
    %s130 = sphi 0, %s116
    %s136 = sphi 0, %s138
    %s139 = sphi 0, %s136
    %s140 = sphi 0, %s139
    %s156 = sphi 0, %s140
    %s160 = sphi 0, %s160
    %s162 = sphi 0, %s160
    %s163 = sphi 0, %s162
    %s177 = sphi 0, %s163
    %s181 = sphi 0, %s181
    %s183 = sphi 0, %s181
    %s184 = sphi 0, %s183
    %s198 = sphi 0, %s184
    %s202 = sphi 0, %s202
    %s204 = sphi 0, %s202
    %s205 = sphi 0, %s204
    %s219 = sphi 0, %s205
    %s225 = sphi 0, %s227
    %s228 = sphi 0, %s225
    %s229 = sphi 0, %s228
    %s245 = sphi 0, %s229
  $region4: #{qbottleneck_ins_forward.5} parent=0 // loop_header_branch
    %19 = sbr.rel (%p17) target = $region8
  $region5: #{qbottleneck_ins_forward.5} parent=0 // loop_body
    %s21 = ssub.s32 %s16, 1
    %s22 = ssub.s32 %s16, 2
    %s23 = sadd.s32 %s16, 1
    %s25 = sadd.s32 %s24, 1
    %p28 = scmp.eq.s32.totalorder %s16, 1
    %p29 = scmp.ne.s32.totalorder %s24, %s26
    %p30 = scmp.eq.s32.totalorder %s16, 0
    %p31 = por %p29, %p30
    %p32 = scmp.ne.s32.totalorder %s24, %s26
    %p33 = scmp.eq.s32.totalorder %s21, 1
    %p34 = por %p32, %p33
    %p35 = scmp.ne.s32.totalorder %s26, %s27
    %p36 = scmp.eq.s32.totalorder %s21, 0
    %p37 = por %p35, %p36
    %p38 = scmp.ne.s32.totalorder %s26, %s27
    %p39 = scmp.eq.s32.totalorder %s22, 1
    %p40 = por %p38, %p39
    %p42 = scmp.ne.s32.totalorder %s27, %s41
    %p43 = scmp.eq.s32.totalorder %s22, 0
    %p44 = por %p42, %p43
    %s45 = ssub.s32 %s16, %s23
    %p46 = scmp.eq.s32.totalorder %s45, 0
    %s48 = sadd.s32 %s47, 1
    %s49 = scalar_select %p46, %s47, %s48
    %p52 = pneg %p46
    %p53 = scmp.eq.s32.totalorder %s16, 1
    %p54 = por %p52, %p53
    %p55 = scmp.ne.s32.totalorder %s47, %s50
    %p56 = scmp.eq.s32.totalorder %s16, 0
    %p57 = por %p55, %p56
    %p58 = scmp.ne.s32.totalorder %s47, %s50
    %p59 = scmp.eq.s32.totalorder %s21, 1
    %p60 = por %p58, %p59
    %p61 = scmp.ne.s32.totalorder %s50, %s51
    %p62 = scmp.eq.s32.totalorder %s21, 0
    %p63 = por %p61, %p62
    %p64 = scmp.ne.s32.totalorder %s50, %s51
    %p65 = scmp.eq.s32.totalorder %s22, 1
    %p66 = por %p64, %p65
    %p68 = scmp.ne.s32.totalorder %s51, %s67
    %p69 = scmp.eq.s32.totalorder %s22, 0
    %p70 = por %p68, %p69
    %s72 = sadd.s32 %s71, 1
    %p75 = scmp.eq.s32.totalorder %s16, 1
    %p76 = scmp.ne.s32.totalorder %s71, %s73
    %p77 = scmp.eq.s32.totalorder %s16, 0
    %p78 = por %p76, %p77
    %p79 = scmp.ne.s32.totalorder %s71, %s73
    %p80 = scmp.eq.s32.totalorder %s21, 1
    %p81 = por %p79, %p80
    %p82 = scmp.ne.s32.totalorder %s73, %s74
    %p83 = scmp.eq.s32.totalorder %s21, 0
    %p84 = por %p82, %p83
    %p85 = scmp.ne.s32.totalorder %s73, %s74
    %p86 = scmp.eq.s32.totalorder %s22, 1
    %p87 = por %p85, %p86
    %p89 = scmp.ne.s32.totalorder %s74, %s88
    %p90 = scmp.eq.s32.totalorder %s22, 0
    %p91 = por %p89, %p90
    %s93 = sadd.s32 %s92, 1
    %p96 = scmp.eq.s32.totalorder %s16, 1
    %p97 = scmp.ne.s32.totalorder %s92, %s94
    %p98 = scmp.eq.s32.totalorder %s16, 0
    %p99 = por %p97, %p98
    %p100 = scmp.ne.s32.totalorder %s92, %s94
    %p101 = scmp.eq.s32.totalorder %s21, 1
    %p102 = por %p100, %p101
    %p103 = scmp.ne.s32.totalorder %s94, %s95
    %p104 = scmp.eq.s32.totalorder %s21, 0
    %p105 = por %p103, %p104
    %p106 = scmp.ne.s32.totalorder %s94, %s95
    %p107 = scmp.eq.s32.totalorder %s22, 1
    %p108 = por %p106, %p107
    %p110 = scmp.ne.s32.totalorder %s95, %s109
    %p111 = scmp.eq.s32.totalorder %s22, 0
    %p112 = por %p110, %p111
    %s114 = sadd.s32 %s113, 1
    %p117 = scmp.eq.s32.totalorder %s16, 1
    %p118 = scmp.ne.s32.totalorder %s113, %s115
    %p119 = scmp.eq.s32.totalorder %s16, 0
    %p120 = por %p118, %p119
    %p121 = scmp.ne.s32.totalorder %s113, %s115
    %p122 = scmp.eq.s32.totalorder %s21, 1
    %p123 = por %p121, %p122
    %p124 = scmp.ne.s32.totalorder %s115, %s116
    %p125 = scmp.eq.s32.totalorder %s21, 0
    %p126 = por %p124, %p125
    %p127 = scmp.ne.s32.totalorder %s115, %s116
    %p128 = scmp.eq.s32.totalorder %s22, 1
    %p129 = por %p127, %p128
    %p131 = scmp.ne.s32.totalorder %s116, %s130
    %p132 = scmp.eq.s32.totalorder %s22, 0
    %p133 = por %p131, %p132
    %s134 = ssub.s32 %s16, %s23
    %p135 = scmp.eq.s32.totalorder %s134, 0
    %s137 = sadd.s32 %s136, 1
    %s138 = scalar_select %p135, %s136, %s137
    %p141 = pneg %p135
    %p142 = scmp.eq.s32.totalorder %s16, 1
    %p143 = por %p141, %p142
    %p144 = scmp.ne.s32.totalorder %s136, %s139
    %p145 = scmp.eq.s32.totalorder %s16, 0
    %p146 = por %p144, %p145
    %p147 = scmp.ne.s32.totalorder %s136, %s139
    %p148 = scmp.eq.s32.totalorder %s21, 1
    %p149 = por %p147, %p148
    %p150 = scmp.ne.s32.totalorder %s139, %s140
    %p151 = scmp.eq.s32.totalorder %s21, 0
    %p152 = por %p150, %p151
    %p153 = scmp.ne.s32.totalorder %s139, %s140
    %p154 = scmp.eq.s32.totalorder %s22, 1
    %p155 = por %p153, %p154
    %p157 = scmp.ne.s32.totalorder %s140, %s156
    %p158 = scmp.eq.s32.totalorder %s22, 0
    %p159 = por %p157, %p158
    %s161 = sadd.s32 %s160, 1
    %p164 = scmp.eq.s32.totalorder %s16, 1
    %p165 = scmp.ne.s32.totalorder %s160, %s162
    %p166 = scmp.eq.s32.totalorder %s16, 0
    %p167 = por %p165, %p166
    %p168 = scmp.ne.s32.totalorder %s160, %s162
    %p169 = scmp.eq.s32.totalorder %s21, 1
    %p170 = por %p168, %p169
    %p171 = scmp.ne.s32.totalorder %s162, %s163
    %p172 = scmp.eq.s32.totalorder %s21, 0
    %p173 = por %p171, %p172
    %p174 = scmp.ne.s32.totalorder %s162, %s163
    %p175 = scmp.eq.s32.totalorder %s22, 1
    %p176 = por %p174, %p175
    %p178 = scmp.ne.s32.totalorder %s163, %s177
    %p179 = scmp.eq.s32.totalorder %s22, 0
    %p180 = por %p178, %p179
    %s182 = sadd.s32 %s181, 1
    %p185 = scmp.eq.s32.totalorder %s16, 1
    %p186 = scmp.ne.s32.totalorder %s181, %s183
    %p187 = scmp.eq.s32.totalorder %s16, 0
    %p188 = por %p186, %p187
    %p189 = scmp.ne.s32.totalorder %s181, %s183
    %p190 = scmp.eq.s32.totalorder %s21, 1
    %p191 = por %p189, %p190
    %p192 = scmp.ne.s32.totalorder %s183, %s184
    %p193 = scmp.eq.s32.totalorder %s21, 0
    %p194 = por %p192, %p193
    %p195 = scmp.ne.s32.totalorder %s183, %s184
    %p196 = scmp.eq.s32.totalorder %s22, 1
    %p197 = por %p195, %p196
    %p199 = scmp.ne.s32.totalorder %s184, %s198
    %p200 = scmp.eq.s32.totalorder %s22, 0
    %p201 = por %p199, %p200
    %s203 = sadd.s32 %s202, 1
    %p206 = scmp.eq.s32.totalorder %s16, 1
    %p207 = scmp.ne.s32.totalorder %s202, %s204
    %p208 = scmp.eq.s32.totalorder %s16, 0
    %p209 = por %p207, %p208
    %p210 = scmp.ne.s32.totalorder %s202, %s204
    %p211 = scmp.eq.s32.totalorder %s21, 1
    %p212 = por %p210, %p211
    %p213 = scmp.ne.s32.totalorder %s204, %s205
    %p214 = scmp.eq.s32.totalorder %s21, 0
    %p215 = por %p213, %p214
    %p216 = scmp.ne.s32.totalorder %s204, %s205
    %p217 = scmp.eq.s32.totalorder %s22, 1
    %p218 = por %p216, %p217
    %p220 = scmp.ne.s32.totalorder %s205, %s219
    %p221 = scmp.eq.s32.totalorder %s22, 0
    %p222 = por %p220, %p221
    %s223 = ssub.s32 %s16, %s23
    %p224 = scmp.eq.s32.totalorder %s223, 0
    %s226 = sadd.s32 %s225, 1
    %s227 = scalar_select %p224, %s225, %s226
    %p230 = pneg %p224
    %p231 = scmp.eq.s32.totalorder %s16, 1
    %p232 = por %p230, %p231
    %p233 = scmp.ne.s32.totalorder %s225, %s228
    %p234 = scmp.eq.s32.totalorder %s16, 0
    %p235 = por %p233, %p234
    %p236 = scmp.ne.s32.totalorder %s225, %s228
    %p237 = scmp.eq.s32.totalorder %s21, 1
    %p238 = por %p236, %p237
    %p239 = scmp.ne.s32.totalorder %s228, %s229
    %p240 = scmp.eq.s32.totalorder %s21, 0
    %p241 = por %p239, %p240
    %p242 = scmp.ne.s32.totalorder %s228, %s229
    %p243 = scmp.eq.s32.totalorder %s22, 1
    %p244 = por %p242, %p243
    %p246 = scmp.ne.s32.totalorder %s229, %s245
    %p247 = scmp.eq.s32.totalorder %s22, 0
    %p248 = por %p246, %p247
    %p249 = scmp.le.s32.totalorder 1, %s16
    %p250 = scmp.lt.s32.totalorder %s16, 3
    %p251 = pnand %p249, %p250
    %p252 = pneg %p251
    // Predicated region
    $region9: #{qbottleneck_ins_forward.5} parent=5 // pred_check
      _
    $region10: #{qbottleneck_ins_forward.5} parent=5 // pred_check_branch
      %254 = sbr.rel (%p251) target = $region12
    $region11: #{qbottleneck_ins_forward.5} parent=5 // pred_region
      %s255 = ssub.s32 %s16, 1
      // Predicated region
      $region13: #{qbottleneck_ins_forward.5} parent=11 // pred_check
        %p256 = pneg %p37
      $region14: #{qbottleneck_ins_forward.5} parent=11 // pred_check_branch
        %258 = sbr.rel (%p256) target = $region16
      $region15: #{qbottleneck_ins_forward.5} parent=11 // pred_region
        _
      $region16: #{qbottleneck_ins_forward.5} parent=11 // pred_fallthru
        _
      // Predicated region
      $region17: #{qbottleneck_ins_forward.5} parent=11 // pred_check
        %p259 = pneg %p84
      $region18: #{qbottleneck_ins_forward.5} parent=11 // pred_check_branch
        %261 = sbr.rel (%p259) target = $region20
      $region19: #{qbottleneck_ins_forward.5} parent=11 // pred_region
        _
      $region20: #{qbottleneck_ins_forward.5} parent=11 // pred_fallthru
        _
      // Predicated region
      $region21: #{qbottleneck_ins_forward.5} parent=11 // pred_check
        %p262 = pneg %p105
      $region22: #{qbottleneck_ins_forward.5} parent=11 // pred_check_branch
        %264 = sbr.rel (%p262) target = $region24
      $region23: #{qbottleneck_ins_forward.5} parent=11 // pred_region
        _
      $region24: #{qbottleneck_ins_forward.5} parent=11 // pred_fallthru
        _
      // Predicated region
      $region25: #{qbottleneck_ins_forward.5} parent=11 // pred_check
        %p265 = pneg %p126
      $region26: #{qbottleneck_ins_forward.5} parent=11 // pred_check_branch
        %267 = sbr.rel (%p265) target = $region28
      $region27: #{qbottleneck_ins_forward.5} parent=11 // pred_region
        _
      $region28: #{qbottleneck_ins_forward.5} parent=11 // pred_fallthru
        _
      // Predicated region
      $region29: #{qbottleneck_ins_forward.5} parent=11 // pred_check
        %p268 = pneg %p173
      $region30: #{qbottleneck_ins_forward.5} parent=11 // pred_check_branch
        %270 = sbr.rel (%p268) target = $region32
      $region31: #{qbottleneck_ins_forward.5} parent=11 // pred_region
        _
      $region32: #{qbottleneck_ins_forward.5} parent=11 // pred_fallthru
        _
      // Predicated region
      $region33: #{qbottleneck_ins_forward.5} parent=11 // pred_check
        %p271 = pneg %p194
      $region34: #{qbottleneck_ins_forward.5} parent=11 // pred_check_branch
        %273 = sbr.rel (%p271) target = $region36
      $region35: #{qbottleneck_ins_forward.5} parent=11 // pred_region
        _
      $region36: #{qbottleneck_ins_forward.5} parent=11 // pred_fallthru
        _
      // Predicated region
      $region37: #{qbottleneck_ins_forward.5} parent=11 // pred_check
        %p274 = pneg %p215
      $region38: #{qbottleneck_ins_forward.5} parent=11 // pred_check_branch
        %276 = sbr.rel (%p274) target = $region40
      $region39: #{qbottleneck_ins_forward.5} parent=11 // pred_region
        _
      $region40: #{qbottleneck_ins_forward.5} parent=11 // pred_fallthru
        _
    $region12: #{qbottleneck_ins_forward.5} parent=5 // pred_fallthru
      _
    %p277 = scmp.lt.s32.totalorder %s16, 2
    // Predicated region
    $region41: #{qbottleneck_ins_forward.5} parent=5 // pred_check
      %p278 = pneg %p277
    $region42: #{qbottleneck_ins_forward.5} parent=5 // pred_check_branch
      %280 = sbr.rel (%p278) target = $region44
    $region43: #{qbottleneck_ins_forward.5} parent=5 // pred_region
      // Predicated region
      $region45: #{qbottleneck_ins_forward.5} parent=43 // pred_check
        %p281 = pneg %p57
      $region46: #{qbottleneck_ins_forward.5} parent=43 // pred_check_branch
        %283 = sbr.rel (%p281) target = $region48
      $region47: #{qbottleneck_ins_forward.5} parent=43 // pred_region
        %p284 = scmp.lt.s32.totalorder %s16, 1
        %s285 = scalar_select %p284, %s16, 1
        %s286 = smul.addr %s285, 8
        %s287 = smul.addr %s286, 8
        %s288 = scalar_lea.vmem %s1, %s287
      $region48: #{qbottleneck_ins_forward.5} parent=43 // pred_fallthru
        _
      // Predicated region
      $region49: #{qbottleneck_ins_forward.5} parent=43 // pred_check
        %p289 = pneg %p146
      $region50: #{qbottleneck_ins_forward.5} parent=43 // pred_check_branch
        %291 = sbr.rel (%p289) target = $region52
      $region51: #{qbottleneck_ins_forward.5} parent=43 // pred_region
        %p292 = scmp.lt.s32.totalorder %s16, 1
        %s293 = scalar_select %p292, %s16, 1
        %s294 = smul.addr %s293, 8
        %s295 = smul.addr %s294, 8
        %s296 = scalar_lea.vmem %s5, %s295
      $region52: #{qbottleneck_ins_forward.5} parent=43 // pred_fallthru
        _
    $region44: #{qbottleneck_ins_forward.5} parent=5 // pred_fallthru
      _
    %p297 = scmp.le.s32.totalorder 1, %s16
    %p298 = scmp.lt.s32.totalorder %s16, 3
    %p299 = pnand %p297, %p298
    %p300 = pneg %p299
    // Predicated region
    $region53: #{qbottleneck_ins_forward.5} parent=5 // pred_check
      _
    $region54: #{qbottleneck_ins_forward.5} parent=5 // pred_check_branch
      %302 = sbr.rel (%p299) target = $region56
    $region55: #{qbottleneck_ins_forward.5} parent=5 // pred_region
      %s303 = ssub.s32 %s16, 1
      %p304 = pneg %p37
      %p305 = pneg %p34
      %p306 = scmp.lt.s32.totalorder %s21, 1
      %s307 = scalar_select %p306, %s21, 1
      %s308 = smul.addr %s307, 8
      %s309 = smul.addr %s308, 8
      %s310 = scalar_lea.vmem %s1, %s309
      %p311 = pneg %p63
      %p312 = pneg %p60
      %p313 = pneg %p84
      %p314 = pneg %p81
      %p315 = pneg %p105
      %p316 = pneg %p102
      %p317 = pneg %p126
      %p318 = pneg %p123
      %p319 = scmp.lt.s32.totalorder %s21, 1
      %s320 = scalar_select %p319, %s21, 1
      %s321 = smul.addr %s320, 8
      %s322 = smul.addr %s321, 8
      %s323 = scalar_lea.vmem %s5, %s322
      %p324 = pneg %p152
      %p325 = pneg %p149
      %p326 = pneg %p173
      %p327 = pneg %p170
      %p328 = pneg %p194
      %p329 = pneg %p191
      %p330 = pneg %p215
      %p331 = pneg %p212
      %p332 = pneg %p241
      %p333 = pneg %p238
      %p334 = scmp.lt.s32.totalorder %s21, 1
      %s335 = scalar_select %p334, %s21, 1
      %s336 = smul.addr %s335, 8
      %s337 = smul.addr %s336, 8
      %s338 = scalar_lea.vmem %s9, %s337
      %p339 = scmp.lt.s32.totalorder %s21, 1
      %s340 = scalar_select %p339, %s21, 1
      %s341 = smul.addr %s340, 8
      %s342 = smul.addr %s341, 8
      %s343 = scalar_lea.vmem %s1, %s342
      %p344 = scmp.lt.s32.totalorder %s21, 1
      %s345 = scalar_select %p344, %s21, 1
      %s346 = smul.addr %s345, 8
      %s347 = smul.addr %s346, 8
      %s348 = scalar_lea.vmem %s5, %s347
      %p349 = scmp.lt.s32.totalorder %s21, 1
      %s350 = scalar_select %p349, %s21, 1
      %s351 = smul.addr %s350, 8
      %s352 = smul.addr %s351, 8
      %s353 = scalar_lea.vmem %s9, %s352
      %v354 = vld [vmem:[%s343] sm:$0xff]
      %v355 = vld [vmem:[%s343 + $0x8] sm:$0xff]
      %v356 = vld [vmem:[%s343 + $0x10] sm:$0xff]
      %v357 = vld [vmem:[%s343 + $0x18] sm:$0xff]
      %v358 = vld [vmem:[%s343 + $0x20] sm:$0xff]
      %v359 = vld [vmem:[%s343 + $0x28] sm:$0xff]
      %v360 = vld [vmem:[%s343 + $0x30] sm:$0xff]
      %v361 = vld [vmem:[%s343 + $0x38] sm:$0xff]
      %s362 = sld [smem:[#allocation2]]
      %v363 = vstv %s362
      %v364 = vrcp.pop %v363
      %s365 = vtos %v364
      %v366 = vstv %s365
      %v367 = vmul.f32 %v354, %v366
      %v368 = vmul.f32 %v355, %v366
      %v369 = vmul.f32 %v356, %v366
      %v370 = vmul.f32 %v357, %v366
      %v371 = vmul.f32 %v358, %v366
      %v372 = vmul.f32 %v359, %v366
      %v373 = vmul.f32 %v360, %v366
      %v374 = vmul.f32 %v361, %v366
      %v375 = vround.ne.pseudo %v367
      %v376 = vround.ne.pseudo %v368
      %v377 = vround.ne.pseudo %v369
      %v378 = vround.ne.pseudo %v370
      %v379 = vround.ne.pseudo %v371
      %v380 = vround.ne.pseudo %v372
      %v381 = vround.ne.pseudo %v373
      %v382 = vround.ne.pseudo %v374
      %v383 = vmax.f32 %v375, -128.0
      %v384 = vmax.f32 %v376, -128.0
      %v385 = vmax.f32 %v377, -128.0
      %v386 = vmax.f32 %v378, -128.0
      %v387 = vmax.f32 %v379, -128.0
      %v388 = vmax.f32 %v380, -128.0
      %v389 = vmax.f32 %v381, -128.0
      %v390 = vmax.f32 %v382, -128.0
      %v391 = vmin.f32 %v383, 127.0
      %v392 = vmin.f32 %v384, 127.0
      %v393 = vmin.f32 %v385, 127.0
      %v394 = vmin.f32 %v386, 127.0
      %v395 = vmin.f32 %v387, 127.0
      %v396 = vmin.f32 %v388, 127.0
      %v397 = vmin.f32 %v389, 127.0
      %v398 = vmin.f32 %v390, 127.0
      %v399 = vstv %s362
      %v400 = vmul.f32 %v391, %v399
      %v401 = vmul.f32 %v392, %v399
      %v402 = vmul.f32 %v393, %v399
      %v403 = vmul.f32 %v394, %v399
      %v404 = vmul.f32 %v395, %v399
      %v405 = vmul.f32 %v396, %v399
      %v406 = vmul.f32 %v397, %v399
      %v407 = vmul.f32 %v398, %v399
      %v408 = vld [vmem:[%s2] sm:$0xff]
      %v409 = vld [vmem:[%s2 + $0x8] sm:$0xff]
      %v410 = vld [vmem:[%s2 + $0x10] sm:$0xff]
      %v411 = vld [vmem:[%s2 + $0x18] sm:$0xff]
      %v412 = vld [vmem:[%s2 + $0x20] sm:$0xff]
      %v413 = vld [vmem:[%s2 + $0x28] sm:$0xff]
      %v414 = vld [vmem:[%s2 + $0x30] sm:$0xff]
      %v415 = vld [vmem:[%s2 + $0x38] sm:$0xff]
      %v416 = vld [vmem:[%s2 + $0x40] sm:$0xff]
      %v417 = vld [vmem:[%s2 + $0x48] sm:$0xff]
      %v418 = vld [vmem:[%s2 + $0x50] sm:$0xff]
      %v419 = vld [vmem:[%s2 + $0x58] sm:$0xff]
      %v420 = vld [vmem:[%s2 + $0x60] sm:$0xff]
      %v421 = vld [vmem:[%s2 + $0x68] sm:$0xff]
      %v422 = vld [vmem:[%s2 + $0x70] sm:$0xff]
      %v423 = vld [vmem:[%s2 + $0x78] sm:$0xff]
      %424 = vmatprep.subr.mxu0 0.0
      %425 = vmatpush1.msra.mxu0 %v423
      %426 = vmatprep.subr.mxu0 0.0
      %427 = vmatpush1.msra.mxu0 %v422
      %428 = vmatprep.subr.mxu0 0.0
      %429 = vmatpush1.msra.mxu0 %v421
      %430 = vmatprep.subr.mxu0 0.0
      %431 = vmatpush1.msra.mxu0 %v420
      %432 = vmatprep.subr.mxu0 0.0
      %433 = vmatpush1.msra.mxu0 %v419
      %434 = vmatprep.subr.mxu0 0.0
      %435 = vmatpush1.msra.mxu0 %v418
      %436 = vmatprep.subr.mxu0 0.0
      %437 = vmatpush1.msra.mxu0 %v417
      %438 = vmatprep.subr.mxu0 0.0
      %439 = vmatpush1.msra.mxu0 %v416
      %440 = vmatprep.subr.mxu0 0.0
      %441 = vmatpush1.msra.mxu0 %v415
      %442 = vmatprep.subr.mxu0 0.0
      %443 = vmatpush1.msra.mxu0 %v414
      %444 = vmatprep.subr.mxu0 0.0
      %445 = vmatpush1.msra.mxu0 %v413
      %446 = vmatprep.subr.mxu0 0.0
      %447 = vmatpush1.msra.mxu0 %v412
      %448 = vmatprep.subr.mxu0 0.0
      %449 = vmatpush1.msra.mxu0 %v411
      %450 = vmatprep.subr.mxu0 0.0
      %451 = vmatpush1.msra.mxu0 %v410
      %452 = vmatprep.subr.mxu0 0.0
      %453 = vmatpush1.msra.mxu0 %v409
      %454 = vmatprep.subr.mxu0 0.0
      %455 = vmatpush1.msra.mxu0 %v408
      %456 = vmatprep.subr.mxu0 0.0
      %457 = vmatpush2.msra.mxu0 0.0
      %458 = vmatprep.subr.mxu0 0.0
      %459 = vmatpush2.msra.mxu0 0.0
      %460 = vmatprep.subr.mxu0 0.0
      %461 = vmatpush2.msra.mxu0 0.0
      %462 = vmatprep.subr.mxu0 0.0
      %463 = vmatpush2.msra.mxu0 0.0
      %464 = vmatprep.subr.mxu0 0.0
      %465 = vmatpush2.msra.mxu0 0.0
      %466 = vmatprep.subr.mxu0 0.0
      %467 = vmatpush2.msra.mxu0 0.0
      %468 = vmatprep.subr.mxu0 0.0
      %469 = vmatpush2.msra.mxu0 0.0
      %470 = vmatprep.subr.mxu0 0.0
      %471 = vmatpush2.msra.mxu0 0.0
      %472 = vmatprep.subr.mxu0 0.0
      %473 = vmatpush2.msra.mxu0 0.0
      %474 = vmatprep.subr.mxu0 0.0
      %475 = vmatpush2.msra.mxu0 0.0
      %476 = vmatprep.subr.mxu0 0.0
      %477 = vmatpush2.msra.mxu0 0.0
      %478 = vmatprep.subr.mxu0 0.0
      %479 = vmatpush2.msra.mxu0 0.0
      %480 = vmatprep.subr.mxu0 0.0
      %481 = vmatpush2.msra.mxu0 0.0
      %482 = vmatprep.subr.mxu0 0.0
      %483 = vmatpush2.msra.mxu0 0.0
      %484 = vmatprep.subr.mxu0 0.0
      %485 = vmatpush2.msra.mxu0 0.0
      %486 = vmatprep.subr.mxu0 0.0
      %487 = vmatpush2.msra.mxu0 0.0
      %488 = vmatprep.mubr.f32.mxu0 0.0
      %489 = vmatmul.mubr.f32.gmra.mxu0 %v400
      %v490 = vpop.f32.mrf.mxu0
      %v491 = vadd.f32 0.0, %v490
      %v492 = vpop.f32.mrf.mxu0
      %493 = vmatprep.mubr.f32.mxu0 0.0
      %494 = vmatmul.mubr.f32.gmra.mxu0 %v401
      %v495 = vpop.f32.mrf.mxu0
      %v496 = vadd.f32 0.0, %v495
      %v497 = vpop.f32.mrf.mxu0
      %498 = vmatprep.mubr.f32.mxu0 0.0
      %499 = vmatmul.mubr.f32.gmra.mxu0 %v402
      %v500 = vpop.f32.mrf.mxu0
      %v501 = vadd.f32 0.0, %v500
      %v502 = vpop.f32.mrf.mxu0
      %503 = vmatprep.mubr.f32.mxu0 0.0
      %504 = vmatmul.mubr.f32.gmra.mxu0 %v403
      %v505 = vpop.f32.mrf.mxu0
      %v506 = vadd.f32 0.0, %v505
      %v507 = vpop.f32.mrf.mxu0
      %508 = vmatprep.mubr.f32.mxu0 0.0
      %509 = vmatmul.mubr.f32.gmra.mxu0 %v404
      %v510 = vpop.f32.mrf.mxu0
      %v511 = vadd.f32 0.0, %v510
      %v512 = vpop.f32.mrf.mxu0
      %513 = vmatprep.mubr.f32.mxu0 0.0
      %514 = vmatmul.mubr.f32.gmra.mxu0 %v405
      %v515 = vpop.f32.mrf.mxu0
      %v516 = vadd.f32 0.0, %v515
      %v517 = vpop.f32.mrf.mxu0
      %518 = vmatprep.mubr.f32.mxu0 0.0
      %519 = vmatmul.mubr.f32.gmra.mxu0 %v406
      %v520 = vpop.f32.mrf.mxu0
      %v521 = vadd.f32 0.0, %v520
      %v522 = vpop.f32.mrf.mxu0
      %523 = vmatprep.mubr.f32.mxu0 0.0
      %524 = vmatmul.mubr.f32.gmra.mxu0 %v407
      %v525 = vpop.f32.mrf.mxu0
      %v526 = vadd.f32 0.0, %v525
      %v527 = vpop.f32.mrf.mxu0
      %528 = vdwg.mxu0
      %v529 = vld [vmem:[%s3] sm:$0x1]
      %v530 = vld [vmem:[%s4] sm:$0x1]
      %v531 = vadd.f32 %v491, %v496
      %v532 = vadd.f32 %v531, %v501
      %v533 = vadd.f32 %v532, %v506
      %v534 = vadd.f32 %v533, %v511
      %v535 = vadd.f32 %v534, %v516
      %v536 = vadd.f32 %v535, %v521
      %v537 = vadd.f32 %v536, %v526
      %v538 = vrot.slane %v537, 4
      %v539 = vadd.f32 %v537, %v538
      %v540 = vrot.slane %v539, 2
      %v541 = vadd.f32 %v539, %v540
      %v542 = vrot.slane %v541, 1
      %v543 = vadd.f32 %v541, %v542
      %v544 = vrcp.pop 64.0
      %v545 = vmul.f32 %v543, %v544
      %v546 = vsub.f32 %v491, %v545
      %v547 = vsub.f32 %v496, %v545
      %v548 = vsub.f32 %v501, %v545
      %v549 = vsub.f32 %v506, %v545
      %v550 = vsub.f32 %v511, %v545
      %v551 = vsub.f32 %v516, %v545
      %v552 = vsub.f32 %v521, %v545
      %v553 = vsub.f32 %v526, %v545
      %v554 = vmul.f32 %v546, %v546
      %v555 = vmul.f32 %v547, %v547
      %v556 = vmul.f32 %v548, %v548
      %v557 = vmul.f32 %v549, %v549
      %v558 = vmul.f32 %v550, %v550
      %v559 = vmul.f32 %v551, %v551
      %v560 = vmul.f32 %v552, %v552
      %v561 = vmul.f32 %v553, %v553
      %v562 = vadd.f32 %v554, %v555
      %v563 = vadd.f32 %v562, %v556
      %v564 = vadd.f32 %v563, %v557
      %v565 = vadd.f32 %v564, %v558
      %v566 = vadd.f32 %v565, %v559
      %v567 = vadd.f32 %v566, %v560
      %v568 = vadd.f32 %v567, %v561
      %v569 = vrot.slane %v568, 4
      %v570 = vadd.f32 %v568, %v569
      %v571 = vrot.slane %v570, 2
      %v572 = vadd.f32 %v570, %v571
      %v573 = vrot.slane %v572, 1
      %v574 = vadd.f32 %v572, %v573
      %v575 = vmul.f32 %v574, %v544
      %v576 = vadd.f32 %v575, 1e-05
      %v577 = vrsqrt.pop %v576
      %v578 = vmul.f32 %v546, %v577
      %v579 = vmul.f32 %v547, %v577
      %v580 = vmul.f32 %v548, %v577
      %v581 = vmul.f32 %v549, %v577
      %v582 = vmul.f32 %v550, %v577
      %v583 = vmul.f32 %v551, %v577
      %v584 = vmul.f32 %v552, %v577
      %v585 = vmul.f32 %v553, %v577
      %v587 = vlaneseq
      %v588 = vshrl.u32 %v587, 7
      %v589 = vsub.s32 0, %v588
      %v590 = vrot.slane %v529, %v589
      %v592 = vmul.f32 %v578, %v590
      %v593 = vmul.f32 %v579, %v590
      %v594 = vmul.f32 %v580, %v590
      %v595 = vmul.f32 %v581, %v590
      %v596 = vmul.f32 %v582, %v590
      %v597 = vmul.f32 %v583, %v590
      %v598 = vmul.f32 %v584, %v590
      %v599 = vmul.f32 %v585, %v590
      %v601 = vlaneseq
      %v602 = vshrl.u32 %v601, 7
      %v603 = vsub.s32 0, %v602
      %v604 = vrot.slane %v530, %v603
      %v606 = vadd.f32 %v592, %v604
      %v607 = vadd.f32 %v593, %v604
      %v608 = vadd.f32 %v594, %v604
      %v609 = vadd.f32 %v595, %v604
      %v610 = vadd.f32 %v596, %v604
      %v611 = vadd.f32 %v597, %v604
      %v612 = vadd.f32 %v598, %v604
      %v613 = vadd.f32 %v599, %v604
      %v614 = vld [vmem:[%s348] sm:$0xff]
      %v615 = vld [vmem:[%s348 + $0x8] sm:$0xff]
      %v616 = vld [vmem:[%s348 + $0x10] sm:$0xff]
      %v617 = vld [vmem:[%s348 + $0x18] sm:$0xff]
      %v618 = vld [vmem:[%s348 + $0x20] sm:$0xff]
      %v619 = vld [vmem:[%s348 + $0x28] sm:$0xff]
      %v620 = vld [vmem:[%s348 + $0x30] sm:$0xff]
      %v621 = vld [vmem:[%s348 + $0x38] sm:$0xff]
      %v622 = vld [vmem:[%s6] sm:$0xff]
      %vm623 = vcmask 64512
      %v625 = vsel %vm623, %v614, 0
      %v628 = vsel %vm623, %v615, 0
      %v631 = vsel %vm623, %v616, 0
      %v634 = vsel %vm623, %v617, 0
      %v637 = vsel %vm623, %v618, 0
      %v640 = vsel %vm623, %v619, 0
      %v643 = vsel %vm623, %v620, 0
      %v646 = vsel %vm623, %v621, 0
      %648 = vmatprep.subr.mxu0 0.0
      %649 = vmatpush1.msra.mxu0 0.0
      %650 = vmatprep.subr.mxu0 0.0
      %651 = vmatpush1.msra.mxu0 0.0
      %652 = vmatprep.subr.mxu0 0.0
      %653 = vmatpush1.msra.mxu0 0.0
      %654 = vmatprep.subr.mxu0 0.0
      %655 = vmatpush1.msra.mxu0 0.0
      %656 = vmatprep.subr.mxu0 0.0
      %657 = vmatpush1.msra.mxu0 0.0
      %658 = vmatprep.subr.mxu0 0.0
      %659 = vmatpush1.msra.mxu0 0.0
      %660 = vmatprep.subr.mxu0 0.0
      %661 = vmatpush1.msra.mxu0 0.0
      %662 = vmatprep.subr.mxu0 0.0
      %663 = vmatpush1.msra.mxu0 0.0
      %664 = vmatprep.subr.mxu0 0.0
      %665 = vmatpush1.msra.mxu0 0.0
      %666 = vmatprep.subr.mxu0 0.0
      %667 = vmatpush1.msra.mxu0 0.0
      %668 = vmatprep.subr.mxu0 0.0
      %669 = vmatpush1.msra.mxu0 0.0
      %670 = vmatprep.subr.mxu0 0.0
      %671 = vmatpush1.msra.mxu0 0.0
      %672 = vmatprep.subr.mxu0 0.0
      %673 = vmatpush1.msra.mxu0 0.0
      %674 = vmatprep.subr.mxu0 0.0
      %675 = vmatpush1.msra.mxu0 0.0
      %676 = vmatprep.subr.mxu0 0.0
      %677 = vmatpush1.msra.mxu0 0.0
      %678 = vmatprep.subr.mxu0 0.0
      %679 = vmatpush1.msra.mxu0 %v622
      %680 = vmatprep.subr.mxu0 0.0
      %681 = vmatpush2.msra.mxu0 0.0
      %682 = vmatprep.subr.mxu0 0.0
      %683 = vmatpush2.msra.mxu0 0.0
      %684 = vmatprep.subr.mxu0 0.0
      %685 = vmatpush2.msra.mxu0 0.0
      %686 = vmatprep.subr.mxu0 0.0
      %687 = vmatpush2.msra.mxu0 0.0
      %688 = vmatprep.subr.mxu0 0.0
      %689 = vmatpush2.msra.mxu0 0.0
      %690 = vmatprep.subr.mxu0 0.0
      %691 = vmatpush2.msra.mxu0 0.0
      %692 = vmatprep.subr.mxu0 0.0
      %693 = vmatpush2.msra.mxu0 0.0
      %694 = vmatprep.subr.mxu0 0.0
      %695 = vmatpush2.msra.mxu0 0.0
      %696 = vmatprep.subr.mxu0 0.0
      %697 = vmatpush2.msra.mxu0 0.0
      %698 = vmatprep.subr.mxu0 0.0
      %699 = vmatpush2.msra.mxu0 0.0
      %700 = vmatprep.subr.mxu0 0.0
      %701 = vmatpush2.msra.mxu0 0.0
      %702 = vmatprep.subr.mxu0 0.0
      %703 = vmatpush2.msra.mxu0 0.0
      %704 = vmatprep.subr.mxu0 0.0
      %705 = vmatpush2.msra.mxu0 0.0
      %706 = vmatprep.subr.mxu0 0.0
      %707 = vmatpush2.msra.mxu0 0.0
      %708 = vmatprep.subr.mxu0 0.0
      %709 = vmatpush2.msra.mxu0 0.0
      %710 = vmatprep.subr.mxu0 0.0
      %711 = vmatpush2.msra.mxu0 0.0
      %712 = vmatprep.mubr.f32.mxu0 0.0
      %713 = vmatmul.mubr.f32.gmra.mxu0 %v625
      %v714 = vpop.f32.mrf.mxu0
      %v715 = vadd.f32 0.0, %v714
      %v716 = vpop.f32.mrf.mxu0
      %717 = vmatprep.mubr.f32.mxu0 0.0
      %718 = vmatmul.mubr.f32.gmra.mxu0 %v628
      %v719 = vpop.f32.mrf.mxu0
      %v720 = vadd.f32 0.0, %v719
      %v721 = vpop.f32.mrf.mxu0
      %722 = vmatprep.mubr.f32.mxu0 0.0
      %723 = vmatmul.mubr.f32.gmra.mxu0 %v631
      %v724 = vpop.f32.mrf.mxu0
      %v725 = vadd.f32 0.0, %v724
      %v726 = vpop.f32.mrf.mxu0
      %727 = vmatprep.mubr.f32.mxu0 0.0
      %728 = vmatmul.mubr.f32.gmra.mxu0 %v634
      %v729 = vpop.f32.mrf.mxu0
      %v730 = vadd.f32 0.0, %v729
      %v731 = vpop.f32.mrf.mxu0
      %732 = vmatprep.mubr.f32.mxu0 0.0
      %733 = vmatmul.mubr.f32.gmra.mxu0 %v637
      %v734 = vpop.f32.mrf.mxu0
      %v735 = vadd.f32 0.0, %v734
      %v736 = vpop.f32.mrf.mxu0
      %737 = vmatprep.mubr.f32.mxu0 0.0
      %738 = vmatmul.mubr.f32.gmra.mxu0 %v640
      %v739 = vpop.f32.mrf.mxu0
      %v740 = vadd.f32 0.0, %v739
      %v741 = vpop.f32.mrf.mxu0
      %742 = vmatprep.mubr.f32.mxu0 0.0
      %743 = vmatmul.mubr.f32.gmra.mxu0 %v643
      %v744 = vpop.f32.mrf.mxu0
      %v745 = vadd.f32 0.0, %v744
      %v746 = vpop.f32.mrf.mxu0
      %747 = vmatprep.mubr.f32.mxu0 0.0
      %748 = vmatmul.mubr.f32.gmra.mxu0 %v646
      %v749 = vpop.f32.mrf.mxu0
      %v750 = vadd.f32 0.0, %v749
      %v751 = vpop.f32.mrf.mxu0
      %752 = vdwg.mxu0
      %v753 = vld [vmem:[%s7] sm:$0x1]
      %v754 = vld [vmem:[%s8] sm:$0x1]
      %v755 = vadd.f32 %v715, %v720
      %v756 = vadd.f32 %v755, %v725
      %v757 = vadd.f32 %v756, %v730
      %v758 = vadd.f32 %v757, %v735
      %v759 = vadd.f32 %v758, %v740
      %v760 = vadd.f32 %v759, %v745
      %v761 = vadd.f32 %v760, %v750
      %v762 = vrot.slane %v761, 4
      %v763 = vadd.f32 %v761, %v762
      %v764 = vrot.slane %v763, 2
      %v765 = vadd.f32 %v763, %v764
      %v766 = vrot.slane %v765, 1
      %v767 = vadd.f32 %v765, %v766
      %v768 = vmul.f32 %v767, %v544
      %v769 = vsub.f32 %v715, %v768
      %v770 = vsub.f32 %v720, %v768
      %v771 = vsub.f32 %v725, %v768
      %v772 = vsub.f32 %v730, %v768
      %v773 = vsub.f32 %v735, %v768
      %v774 = vsub.f32 %v740, %v768
      %v775 = vsub.f32 %v745, %v768
      %v776 = vsub.f32 %v750, %v768
      %v777 = vmul.f32 %v769, %v769
      %v778 = vmul.f32 %v770, %v770
      %v779 = vmul.f32 %v771, %v771
      %v780 = vmul.f32 %v772, %v772
      %v781 = vmul.f32 %v773, %v773
      %v782 = vmul.f32 %v774, %v774
      %v783 = vmul.f32 %v775, %v775
      %v784 = vmul.f32 %v776, %v776
      %v785 = vadd.f32 %v777, %v778
      %v786 = vadd.f32 %v785, %v779
      %v787 = vadd.f32 %v786, %v780
      %v788 = vadd.f32 %v787, %v781
      %v789 = vadd.f32 %v788, %v782
      %v790 = vadd.f32 %v789, %v783
      %v791 = vadd.f32 %v790, %v784
      %v792 = vrot.slane %v791, 4
      %v793 = vadd.f32 %v791, %v792
      %v794 = vrot.slane %v793, 2
      %v795 = vadd.f32 %v793, %v794
      %v796 = vrot.slane %v795, 1
      %v797 = vadd.f32 %v795, %v796
      %v798 = vmul.f32 %v797, %v544
      %v799 = vadd.f32 %v798, 1e-05
      %v800 = vrsqrt.pop %v799
      %v801 = vmul.f32 %v769, %v800
      %v802 = vmul.f32 %v770, %v800
      %v803 = vmul.f32 %v771, %v800
      %v804 = vmul.f32 %v772, %v800
      %v805 = vmul.f32 %v773, %v800
      %v806 = vmul.f32 %v774, %v800
      %v807 = vmul.f32 %v775, %v800
      %v808 = vmul.f32 %v776, %v800
      %v810 = vlaneseq
      %v811 = vshrl.u32 %v810, 7
      %v812 = vsub.s32 0, %v811
      %v813 = vrot.slane %v753, %v812
      %v815 = vmul.f32 %v801, %v813
      %v816 = vmul.f32 %v802, %v813
      %v817 = vmul.f32 %v803, %v813
      %v818 = vmul.f32 %v804, %v813
      %v819 = vmul.f32 %v805, %v813
      %v820 = vmul.f32 %v806, %v813
      %v821 = vmul.f32 %v807, %v813
      %v822 = vmul.f32 %v808, %v813
      %v824 = vlaneseq
      %v825 = vshrl.u32 %v824, 7
      %v826 = vsub.s32 0, %v825
      %v827 = vrot.slane %v754, %v826
      %v829 = vadd.f32 %v815, %v827
      %v830 = vadd.f32 %v816, %v827
      %v831 = vadd.f32 %v817, %v827
      %v832 = vadd.f32 %v818, %v827
      %v833 = vadd.f32 %v819, %v827
      %v834 = vadd.f32 %v820, %v827
      %v835 = vadd.f32 %v821, %v827
      %v836 = vadd.f32 %v822, %v827
      %v837 = vadd.f32 %v606, %v829
      %v838 = vadd.f32 %v607, %v830
      %v839 = vadd.f32 %v608, %v831
      %v840 = vadd.f32 %v609, %v832
      %v841 = vadd.f32 %v610, %v833
      %v842 = vadd.f32 %v611, %v834
      %v843 = vadd.f32 %v612, %v835
      %v844 = vadd.f32 %v613, %v836
      %845 = vst [vmem:[%s353] sm:$0xff] %v837
      %846 = vst [vmem:[%s353 + $0x8] sm:$0xff] %v838
      %847 = vst [vmem:[%s353 + $0x10] sm:$0xff] %v839
      %848 = vst [vmem:[%s353 + $0x18] sm:$0xff] %v840
      %849 = vst [vmem:[%s353 + $0x20] sm:$0xff] %v841
      %850 = vst [vmem:[%s353 + $0x28] sm:$0xff] %v842
      %851 = vst [vmem:[%s353 + $0x30] sm:$0xff] %v843
      %852 = vst [vmem:[%s353 + $0x38] sm:$0xff] %v844
      %p853 = scmp.lt.s32.totalorder %s21, 1
      %s854 = scalar_select %p853, %s21, 1
      %s855 = smul.addr %s854, 8
      %s856 = smul.addr %s855, 8
      %s857 = scalar_lea.vmem %s9, %s856
      // Predicated region
      $region57: #{qbottleneck_ins_forward.5} parent=55 // pred_check
        %p858 = pneg %p238
      $region58: #{qbottleneck_ins_forward.5} parent=55 // pred_check_branch
        %860 = sbr.rel (%p858) target = $region60
      $region59: #{qbottleneck_ins_forward.5} parent=55 // pred_region
        _
      $region60: #{qbottleneck_ins_forward.5} parent=55 // pred_fallthru
        _
    $region56: #{qbottleneck_ins_forward.5} parent=5 // pred_fallthru
      _
    %p861 = scmp.le.s32.totalorder 2, %s16
    // Predicated region
    $region61: #{qbottleneck_ins_forward.5} parent=5 // pred_check
      %p862 = pneg %p861
    $region62: #{qbottleneck_ins_forward.5} parent=5 // pred_check_branch
      %864 = sbr.rel (%p862) target = $region64
    $region63: #{qbottleneck_ins_forward.5} parent=5 // pred_region
      %s865 = ssub.s32 %s16, 2
      // Predicated region
      $region65: #{qbottleneck_ins_forward.5} parent=63 // pred_check
        %p866 = pneg %p244
      $region66: #{qbottleneck_ins_forward.5} parent=63 // pred_check_branch
        %868 = sbr.rel (%p866) target = $region68
      $region67: #{qbottleneck_ins_forward.5} parent=63 // pred_region
        %p869 = scmp.lt.s32.totalorder %s22, 1
        %s870 = scalar_select %p869, %s22, 1
        %s871 = smul.addr %s870, 8
        %s872 = smul.addr %s871, 8
        %s873 = scalar_lea.vmem %s9, %s872
      $region68: #{qbottleneck_ins_forward.5} parent=63 // pred_fallthru
        _
    $region64: #{qbottleneck_ins_forward.5} parent=5 // pred_fallthru
      _
  $region6: #{qbottleneck_ins_forward.5} parent=0 // loop_footer
    %s20 = sadd.s32 1, %s16
  $region7: #{qbottleneck_ins_forward.5} parent=0 // loop_footer_branch
    %15 = sbr.rel target = $region3
  $region8: #{qbottleneck_ins_forward.5} parent=0 // loop_exit
    _

</llo_original>
